<compile_context>
chip_gen: v5e
topology: v5e:2x2
jax: 0.10.0
libtpu: 0.0.40
codegen_flags: <defaults>
</compile_context>

<pallas_src>
import functools
import math

import jax
import jax.numpy as jnp
from jax import lax
from jax.experimental import pallas as pl
from jax.experimental.pallas import tpu as pltpu


# ----------------------------------------------------------------------------
# Kernel 1: in_proj (per-head weight tile) + rotary position embedding
# ----------------------------------------------------------------------------
def _in_proj_rope_kernel(x_ref, w_ref, cos_ref, sin_ref,
                         q_ref, k_ref, v_ref, *, head_dim):
    D = head_dim
    x = x_ref[0].astype(jnp.bfloat16)                    # (TL, E)
    w = w_ref[0]                                         # (E, 3D) bf16, head slice
    qkv = jnp.dot(x, w, preferred_element_type=jnp.float32)   # (TL, 3D) f32

    qh = qkv[:, 0 * D:1 * D]
    kh = qkv[:, 1 * D:2 * D]
    vh = qkv[:, 2 * D:3 * D]

    cos = cos_ref[...]                                   # (TL, D)
    sin = sin_ref[...]                                   # (TL, D), rotate-half sign folded in

    def rope(t):
        # rotate-half via XLU roll; the +/- sign lives in the sin table
        return t * cos + pltpu.roll(t, shift=D // 2, axis=1) * sin

    q_ref[0, 0] = rope(qh)
    k_ref[0, 0] = rope(kh)
    v_ref[0, 0] = vh


# ----------------------------------------------------------------------------
# Kernel 2: causal flash attention (online softmax) + fused out_proj
# ----------------------------------------------------------------------------
def _flash_attn_out_proj_kernel(q_ref, k_ref, v_ref, wo_ref,
                                attn_ref, y_ref,
                                m_ref, l_ref, acc_ref,
                                *, head_dim, tlq, tlk):
    D = head_dim
    i = pl.program_id(1)            # q-tile
    h = pl.program_id(2)            # head
    j = pl.program_id(3)            # kv-tile (innermost, "arbitrary")
    nkv = pl.num_programs(3)

    @pl.when(j == 0)
    def _init():
        m_ref[...] = jnp.full(m_ref.shape, -jnp.inf, dtype=m_ref.dtype)
        l_ref[...] = jnp.zeros(l_ref.shape, dtype=l_ref.dtype)
        acc_ref[...] = jnp.zeros(acc_ref.shape, dtype=acc_ref.dtype)

    # Skip kv tiles that lie entirely above the causal diagonal.
    @pl.when(j * tlk < (i + 1) * tlq)
    def _compute():
        scale = 1.0 / math.sqrt(D)
        qb = (q_ref[0, 0] * scale).astype(jnp.bfloat16)          # (TLq, D)
        kb = k_ref[0, 0].astype(jnp.bfloat16)                    # (TLk, D)
        vb = v_ref[0, 0].astype(jnp.bfloat16)                    # (TLk, D)

        s = lax.dot_general(qb, kb, (((1,), (1,)), ((), ())),
                            preferred_element_type=jnp.float32)  # (TLq, TLk)
        q_pos = i * tlq + lax.broadcasted_iota(jnp.int32, (tlq, tlk), 0)
        k_pos = j * tlk + lax.broadcasted_iota(jnp.int32, (tlq, tlk), 1)
        s = jnp.where(q_pos >= k_pos, s, -1e30)

        m_prev = m_ref[...]
        m_new = jnp.maximum(m_prev, jnp.max(s, axis=-1, keepdims=True))
        alpha = jnp.exp(m_prev - m_new)
        p = jnp.exp(s - m_new)
        l_ref[...] = alpha * l_ref[...] + jnp.sum(p, axis=-1, keepdims=True)
        acc_ref[...] = alpha * acc_ref[...] + jnp.dot(
            p.astype(jnp.bfloat16), vb, preferred_element_type=jnp.float32)
        m_ref[...] = m_new

    @pl.when(j == nkv - 1)
    def _finalize():
        o = acc_ref[...] * pl.reciprocal(l_ref[...], approx=True)   # (TLq, D) f32
        attn_ref[0, 0] = o.astype(attn_ref.dtype)
        # fused out_proj: this head's (D, E) rows of W_out^T, accumulate into y
        y_h = jnp.dot(o.astype(jnp.bfloat16), wo_ref[...],
                      preferred_element_type=jnp.float32)            # (TLq, E)

        @pl.when(h == 0)
        def _():
            y_ref[0] = y_h.astype(y_ref.dtype)

        @pl.when(h > 0)
        def _():
            y_ref[0] = y_ref[0] + y_h.astype(y_ref.dtype)


# ----------------------------------------------------------------------------
# Wrapper
# ----------------------------------------------------------------------------
def openlm_attention_forward(hidden_states, w_in, w_out, *, num_heads,
                             rope_theta=10000.0):
    """First (is_first=True, past_key_value=None, use_cache=True) forward call.

    Returns (out_proj(output), output, (keys, vals, queries)) like the module."""
    B, L, E = hidden_states.shape
    H = num_heads
    D = E // H
    assert H * D == E

    # ---- host-side parameter plumbing (free layout work) --------------------
    # Rotary tables; rotate-half sign folded into the sin table.
    inv_freq = 1.0 / (rope_theta ** (jnp.arange(0, D, 2, dtype=jnp.float32) / D))
    t = jnp.arange(L, dtype=jnp.float32)
    freqs = jnp.outer(t, inv_freq)                       # (L, D/2)
    emb = jnp.concatenate([freqs, freqs], axis=-1)       # (L, D)
    cos = jnp.cos(emb)
    sign = jnp.concatenate([-jnp.ones((D // 2,), jnp.float32),
                            jnp.ones((D // 2,), jnp.float32)])
    sin = jnp.sin(emb) * sign[None, :]

    # W_in^T rearranged into per-head (E, 3D) tiles: [q_h | k_h | v_h] columns.
    w_t = w_in.T                                         # (E, 3E)
    w_q = w_t[:, 0 * E:1 * E].reshape(E, H, D)
    w_k = w_t[:, 1 * E:2 * E].reshape(E, H, D)
    w_v = w_t[:, 2 * E:3 * E].reshape(E, H, D)
    w_in_heads = jnp.transpose(
        jnp.concatenate([w_q, w_k, w_v], axis=-1), (1, 0, 2)).astype(jnp.bfloat16)
    w_out_t = w_out.T.astype(jnp.bfloat16)               # (E, E); rows h*D:(h+1)*D per head

    # ---- kernel 1: in_proj + RoPE -> q/k/v caches in (B, H, L, D) -----------
    tl = min(L, 256)
    assert L % tl == 0, "seq length must be a multiple of the in_proj tile"
    in_proj = functools.partial(_in_proj_rope_kernel, head_dim=D)
    q, k, v = pl.pallas_call(
        in_proj,
        out_shape=tuple(jax.ShapeDtypeStruct((B, H, L, D), jnp.float32)
                        for _ in range(3)),
        grid=(B, L // tl, H),
        in_specs=[
            pl.BlockSpec((1, tl, E), lambda b, i, h: (b, i, 0)),      # x (resident over h)
            pl.BlockSpec((1, E, 3 * D), lambda b, i, h: (h, 0, 0)),   # per-head W_in tile
            pl.BlockSpec((tl, D), lambda b, i, h: (i, 0)),            # cos
            pl.BlockSpec((tl, D), lambda b, i, h: (i, 0)),            # sin (signed)
        ],
        out_specs=tuple(pl.BlockSpec((1, 1, tl, D), lambda b, i, h: (b, h, i, 0))
                        for _ in range(3)),
        compiler_params=pltpu.CompilerParams(
            dimension_semantics=("parallel", "parallel", "parallel"),
            vmem_limit_bytes=32 * 1024 * 1024),
    )(hidden_states, w_in_heads, cos, sin)

    # ---- kernel 2: flash attention + fused out_proj --------------------------
    tlq = min(L, 128)
    tlk = min(L, 128)
    assert L % tlq == 0 and L % tlk == 0
    flash = functools.partial(_flash_attn_out_proj_kernel,
                              head_dim=D, tlq=tlq, tlk=tlk)
    attn_bhld, y = pl.pallas_call(
        flash,
        out_shape=(jax.ShapeDtypeStruct((B, H, L, D), jnp.float32),
                   jax.ShapeDtypeStruct((B, L, E), jnp.float32)),
        grid=(B, L // tlq, H, L // tlk),
        in_specs=[
            pl.BlockSpec((1, 1, tlq, D), lambda b, i, h, j: (b, h, i, 0)),  # q
            pl.BlockSpec((1, 1, tlk, D), lambda b, i, h, j: (b, h, j, 0)),  # k
            pl.BlockSpec((1, 1, tlk, D), lambda b, i, h, j: (b, h, j, 0)),  # v
            pl.BlockSpec((D, E), lambda b, i, h, j: (h, 0)),                # W_out^T head rows
        ],
        out_specs=(
            pl.BlockSpec((1, 1, tlq, D), lambda b, i, h, j: (b, h, i, 0)),  # attn (per head)
            pl.BlockSpec((1, tlq, E), lambda b, i, h, j: (b, i, 0)),        # y (resident over h, j)
        ),
        scratch_shapes=[
            pltpu.VMEM((tlq, 1), jnp.float32),   # running max m
            pltpu.VMEM((tlq, 1), jnp.float32),   # running denom l
            pltpu.VMEM((tlq, D), jnp.float32),   # running numerator acc
        ],
        compiler_params=pltpu.CompilerParams(
            dimension_semantics=("parallel", "parallel", "arbitrary", "arbitrary"),
            vmem_limit_bytes=32 * 1024 * 1024),
    )(q, k, v, w_out_t)

    # ---- cache / output views in the module's layout -------------------------
    keys = jnp.transpose(k, (0, 2, 1, 3))        # (B, L, H, D)
    vals = jnp.transpose(v, (0, 2, 1, 3))
    queries = jnp.transpose(q, (0, 2, 1, 3))
    output = jnp.transpose(attn_bhld, (0, 2, 1, 3)).reshape(B, L, E)
    # TODO(synk): cached decode path (is_first=False / past_key_value concat) is
    # not implemented; only the module's first-call prefill path is covered.
    return y, output, (keys, vals, queries)


# ----------------------------------------------------------------------------
# Pure-JAX f32 reference (sanity check)
# ----------------------------------------------------------------------------
def _reference(hidden_states, w_in, w_out, *, num_heads, rope_theta=10000.0):
    B, L, E = hidden_states.shape
    H = num_heads
    D = E // H
    qkv = jnp.einsum('ble,fe->blf', hidden_states, w_in)
    q, k, v = jnp.split(qkv, 3, axis=-1)
    q = q.reshape(B, L, H, D)
    k = k.reshape(B, L, H, D)
    v = v.reshape(B, L, H, D)

    inv_freq = 1.0 / (rope_theta ** (jnp.arange(0, D, 2, dtype=jnp.float32) / D))
    t = jnp.arange(L, dtype=jnp.float32)
    emb = jnp.concatenate([jnp.outer(t, inv_freq)] * 2, axis=-1)
    cos = jnp.cos(emb)[None, :, None, :]
    sin = jnp.sin(emb)[None, :, None, :]

    def rope(u):
        u1, u2 = u[..., :D // 2], u[..., D // 2:]
        return u * cos + jnp.concatenate([-u2, u1], axis=-1) * sin

    q, k = rope(q), rope(k)
    s = jnp.einsum('bqhd,bkhd->bhqk', q, k) / math.sqrt(D)
    mask = jnp.tril(jnp.ones((L, L), dtype=bool))
    s = jnp.where(mask[None, None], s, -jnp.inf)
    p = jax.nn.softmax(s, axis=-1)
    o = jnp.einsum('bhqk,bkhd->bqhd', p, v)
    out = o.reshape(B, L, E)
    return jnp.einsum('ble,fe->blf', out, w_out), out, (k, v, q)


# ----------------------------------------------------------------------------
# Main
# ----------------------------------------------------------------------------
if __name__ == "__main__":
    # Small but lane-friendly shapes: hidden=256, heads=2 -> head_dim=128,
    # seq=256 exercises multi-tile flash accumulation + causal block skipping.
    B, L, E, H = 2, 256, 256, 2
    key = jax.random.PRNGKey(0)
    kx, kin, kout = jax.random.split(key, 3)

    x = jax.random.normal(kx, (B, L, E), dtype=jnp.float32)
    # nn.Linear weight shapes: (out_features, in_features), no bias
    w_in = jax.random.normal(kin, (3 * E, E), dtype=jnp.float32) * (1.0 / math.sqrt(E))
    w_out = jax.random.normal(kout, (E, E), dtype=jnp.float32) * (1.0 / math.sqrt(E))

    y, output, (keys, vals, queries) = openlm_attention_forward(
        x, w_in, w_out, num_heads=H)
    jax.block_until_ready((y, output, keys, vals, queries))

    y_r, out_r, (k_r, v_r, q_r) = _reference(x, w_in, w_out, num_heads=H)
    tol = dict(atol=3e-2, rtol=3e-2)   # bf16 MXU inputs vs f32 reference
    assert y.shape == (B, L, E) and output.shape == (B, L, E)
    assert keys.shape == (B, L, H, E // H)
    assert vals.shape == (B, L, H, E // H)
    assert queries.shape == (B, L, H, E // H)
    assert jnp.allclose(y, y_r, **tol), float(jnp.max(jnp.abs(y - y_r)))
    assert jnp.allclose(output, out_r, **tol), float(jnp.max(jnp.abs(output - out_r)))
    assert jnp.allclose(keys, k_r, **tol)
    assert jnp.allclose(vals, v_r, **tol)
    assert jnp.allclose(queries, q_r, **tol)

    print("KERNEL_OK")
</pallas_src>

<mosaic_0001>
module attributes {stable_mosaic.version = 11 : i64} {
  func.func @_in_proj_rope_kernel(%arg0: i32, %arg1: i32, %arg2: i32, %arg3: memref<1x256x256xf32, #tpu.memory_space<vmem>>, %arg4: memref<1x256x384xbf16, #tpu.memory_space<vmem>>, %arg5: memref<256x128xf32, #tpu.memory_space<vmem>>, %arg6: memref<256x128xf32, #tpu.memory_space<vmem>>, %arg7: memref<1x1x256x128xf32, #tpu.memory_space<vmem>>, %arg8: memref<1x1x256x128xf32, #tpu.memory_space<vmem>>, %arg9: memref<1x1x256x128xf32, #tpu.memory_space<vmem>>) attributes {dimension_semantics = [#tpu.dimension_semantics<parallel>, #tpu.dimension_semantics<parallel>, #tpu.dimension_semantics<parallel>], iteration_bounds = array<i64: 2, 1, 2>, scalar_prefetch = 0 : i64, scratch_operands = 0 : i64, tpu.core_type = #tpu.core_type<tc>, window_params = [{transform_indices = @transform_0, window_bounds = array<i64: 1, 256, 256>}, {transform_indices = @transform_1, window_bounds = array<i64: 1, 256, 384>}, {transform_indices = @transform_2, window_bounds = array<i64: 256, 128>}, {transform_indices = @transform_3, window_bounds = array<i64: 256, 128>}, {transform_indices = @transform_4, window_bounds = array<i64: 1, 1, 256, 128>}, {transform_indices = @transform_5, window_bounds = array<i64: 1, 1, 256, 128>}, {transform_indices = @transform_6, window_bounds = array<i64: 1, 1, 256, 128>}]} {
    %c0 = arith.constant 0 : index
    %c0_0 = arith.constant 0 : index
    %c0_1 = arith.constant 0 : index
    %0 = vector.load %arg3[%c0, %c0_0, %c0_1] : memref<1x256x256xf32, #tpu.memory_space<vmem>>, vector<1x256x256xf32>
    %1 = vector.shape_cast %0 : vector<1x256x256xf32> to vector<256x256xf32>
    %2 = arith.truncf %1 : vector<256x256xf32> to vector<256x256xbf16>
    %c0_2 = arith.constant 0 : index
    %c0_3 = arith.constant 0 : index
    %c0_4 = arith.constant 0 : index
    %3 = vector.load %arg4[%c0_2, %c0_3, %c0_4] : memref<1x256x384xbf16, #tpu.memory_space<vmem>>, vector<1x256x384xbf16>
    %4 = vector.shape_cast %3 : vector<1x256x384xbf16> to vector<256x384xbf16>
    %cst = arith.constant dense<0.000000e+00> : vector<256x384xf32>
    %5 = tpu.matmul %2, %4, %cst {dimension_numbers = #tpu.dot_dimension_numbers<[1], [0], [0], [1], [0, 0, 1, 1], [], []>} : vector<256x256xbf16>, vector<256x384xbf16>, vector<256x384xf32> -> vector<256x384xf32>
    %6 = vector.extract_strided_slice %5 {offsets = [0, 0], sizes = [256, 128], strides = [1, 1]} : vector<256x384xf32> to vector<256x128xf32>
    %7 = vector.extract_strided_slice %5 {offsets = [0, 128], sizes = [256, 128], strides = [1, 1]} : vector<256x384xf32> to vector<256x128xf32>
    %8 = vector.extract_strided_slice %5 {offsets = [0, 256], sizes = [256, 128], strides = [1, 1]} : vector<256x384xf32> to vector<256x128xf32>
    %c0_5 = arith.constant 0 : index
    %c0_6 = arith.constant 0 : index
    %9 = vector.load %arg5[%c0_5, %c0_6] : memref<256x128xf32, #tpu.memory_space<vmem>>, vector<256x128xf32>
    %c0_7 = arith.constant 0 : index
    %c0_8 = arith.constant 0 : index
    %10 = vector.load %arg6[%c0_7, %c0_8] : memref<256x128xf32, #tpu.memory_space<vmem>>, vector<256x128xf32>
    %11 = arith.mulf %6, %9 : vector<256x128xf32>
    %c64_i32 = arith.constant 64 : i32
    %12 = tpu.dynamic_rotate %6 by %c64_i32 dim 1 : vector<256x128xf32>, i32 -> vector<256x128xf32>
    %13 = arith.mulf %12, %10 : vector<256x128xf32>
    %14 = arith.addf %11, %13 : vector<256x128xf32>
    %c0_9 = arith.constant 0 : index
    %c0_10 = arith.constant 0 : index
    %c0_11 = arith.constant 0 : index
    %c0_12 = arith.constant 0 : index
    %15 = vector.load %arg7[%c0_9, %c0_10, %c0_11, %c0_12] : memref<1x1x256x128xf32, #tpu.memory_space<vmem>>, vector<1x1x256x128xf32>
    %16 = vector.shape_cast %15 : vector<1x1x256x128xf32> to vector<256x128xf32>
    %17 = vector.shape_cast %14 : vector<256x128xf32> to vector<1x1x256x128xf32>
    tpu.vector_store %arg7[%c0_9, %c0_10, %c0_11, %c0_12], %17 {strides = array<i32>} : memref<1x1x256x128xf32, #tpu.memory_space<vmem>>, vector<1x1x256x128xf32>,
    %18 = arith.mulf %7, %9 : vector<256x128xf32>
    %c64_i32_13 = arith.constant 64 : i32
    %19 = tpu.dynamic_rotate %7 by %c64_i32_13 dim 1 : vector<256x128xf32>, i32 -> vector<256x128xf32>
    %20 = arith.mulf %19, %10 : vector<256x128xf32>
    %21 = arith.addf %18, %20 : vector<256x128xf32>
    %c0_14 = arith.constant 0 : index
    %c0_15 = arith.constant 0 : index
    %c0_16 = arith.constant 0 : index
    %c0_17 = arith.constant 0 : index
    %22 = vector.load %arg8[%c0_14, %c0_15, %c0_16, %c0_17] : memref<1x1x256x128xf32, #tpu.memory_space<vmem>>, vector<1x1x256x128xf32>
    %23 = vector.shape_cast %22 : vector<1x1x256x128xf32> to vector<256x128xf32>
    %24 = vector.shape_cast %21 : vector<256x128xf32> to vector<1x1x256x128xf32>
    tpu.vector_store %arg8[%c0_14, %c0_15, %c0_16, %c0_17], %24 {strides = array<i32>} : memref<1x1x256x128xf32, #tpu.memory_space<vmem>>, vector<1x1x256x128xf32>,
    %c0_18 = arith.constant 0 : index
    %c0_19 = arith.constant 0 : index
    %c0_20 = arith.constant 0 : index
    %c0_21 = arith.constant 0 : index
    %25 = vector.load %arg9[%c0_18, %c0_19, %c0_20, %c0_21] : memref<1x1x256x128xf32, #tpu.memory_space<vmem>>, vector<1x1x256x128xf32>
    %26 = vector.shape_cast %25 : vector<1x1x256x128xf32> to vector<256x128xf32>
    %27 = vector.shape_cast %8 : vector<256x128xf32> to vector<1x1x256x128xf32>
    tpu.vector_store %arg9[%c0_18, %c0_19, %c0_20, %c0_21], %27 {strides = array<i32>} : memref<1x1x256x128xf32, #tpu.memory_space<vmem>>, vector<1x1x256x128xf32>,
    return
  }
  func.func @transform_0(%arg0: i32, %arg1: i32, %arg2: i32) -> (i32, i32, i32) {
    %c0_i32 = arith.constant 0 : i32
    %c0_i32_0 = arith.constant 0 : i32
    return %arg0, %arg1, %c0_i32 : i32, i32, i32
  }
  func.func @transform_1(%arg0: i32, %arg1: i32, %arg2: i32) -> (i32, i32, i32) {
    %c0_i32 = arith.constant 0 : i32
    %c0_i32_0 = arith.constant 0 : i32
    %c0_i32_1 = arith.constant 0 : i32
    return %arg2, %c0_i32, %c0_i32_0 : i32, i32, i32
  }
  func.func @transform_2(%arg0: i32, %arg1: i32, %arg2: i32) -> (i32, i32) {
    %c0_i32 = arith.constant 0 : i32
    %c0_i32_0 = arith.constant 0 : i32
    return %arg1, %c0_i32 : i32, i32
  }
  func.func @transform_3(%arg0: i32, %arg1: i32, %arg2: i32) -> (i32, i32) {
    %c0_i32 = arith.constant 0 : i32
    %c0_i32_0 = arith.constant 0 : i32
    return %arg1, %c0_i32 : i32, i32
  }
  func.func @transform_4(%arg0: i32, %arg1: i32, %arg2: i32) -> (i32, i32, i32, i32) {
    %c0_i32 = arith.constant 0 : i32
    %c0_i32_0 = arith.constant 0 : i32
    return %arg0, %arg2, %arg1, %c0_i32 : i32, i32, i32, i32
  }
  func.func @transform_5(%arg0: i32, %arg1: i32, %arg2: i32) -> (i32, i32, i32, i32) {
    %c0_i32 = arith.constant 0 : i32
    %c0_i32_0 = arith.constant 0 : i32
    return %arg0, %arg2, %arg1, %c0_i32 : i32, i32, i32, i32
  }
  func.func @transform_6(%arg0: i32, %arg1: i32, %arg2: i32) -> (i32, i32, i32, i32) {
    %c0_i32 = arith.constant 0 : i32
    %c0_i32_0 = arith.constant 0 : i32
    return %arg0, %arg2, %arg1, %c0_i32 : i32, i32, i32, i32
  }
}

</mosaic_0001>

<llo_original>
// kernel: tpu_custom_call.1
$region0: #{tpu_custom_call.1}
  #allocation0 [shape = 'u32[]', space=smem, size = 0x4, offset = 0x4, fixed_abs, tag = 'smem constant byte address 0x4 - core index']
  #allocation1 [shape = 'u32[72,128]{1,0:T(1,128)}', space=vmem, size = 0x9000, scoped, tag = 'internal scratch']
  %s0 = inlined_call_operand.hbm [shape: f32[2,256,256], index: 0, kind: input, shape index: {}]
  %s1 = inlined_call_operand.hbm [shape: bf16[2,256,384], index: 1, kind: input, shape index: {}]
  %s2 = inlined_call_operand.hbm [shape: f32[256,128], index: 2, kind: input, shape index: {}]
  %s3 = inlined_call_operand.hbm [shape: f32[256,128], index: 3, kind: input, shape index: {}]
  %s4 = inlined_call_operand.hbm [shape: f32[2,2,256,128], index: 4, kind: output, shape index: {0}]
  %s5 = inlined_call_operand.hbm [shape: f32[2,2,256,128], index: 5, kind: output, shape index: {1}]
  %s6 = inlined_call_operand.hbm [shape: f32[2,2,256,128], index: 6, kind: output, shape index: {2}]
  %7 = xla_tuple %s4, %s5, %s6
  %s8 = sld [smem:[#allocation0]]
  $region81: #{tpu_custom_call.1} parent=0
    _
  %s10 = ssub.s32 1, %s8
  %s11 = scalar_select 0, %s10, %s8
  $region1: #{tpu_custom_call.1} parent=0
    #allocation2 [shape = 'u8[524288]{0}', space=vmem, size = 0x80000, scoped, tag = 'input window, operand 0']
    #allocation3 [shape = 's32[2]{0}', space=sflag, size = 0x8, scoped, tag = 'scoped memory for tpu_custom_call.1']
    #allocation4 [shape = 's32[2]{0}', space=sflag, size = 0x8, scoped, tag = 'scoped memory for tpu_custom_call.1']
    #allocation5 [shape = 'u8[393216]{0}', space=vmem, size = 0x60000, scoped, tag = 'input window, operand 1']
    #allocation6 [shape = 's32[2]{0}', space=sflag, size = 0x8, scoped, tag = 'scoped memory for tpu_custom_call.1']
    #allocation7 [shape = 'u8[131072]{0}', space=vmem, size = 0x20000, scoped, tag = 'input window, operand 2, single buffered']
    #allocation8 [shape = 'u8[131072]{0}', space=vmem, size = 0x20000, scoped, tag = 'input window, operand 3, single buffered']
    #allocation9 [shape = 's32[1]{0}', space=sflag, size = 0x4, scoped, tag = 'scoped memory for tpu_custom_call.1']
    #allocation10 [shape = 'u8[262144]{0}', space=vmem, size = 0x40000, scoped, tag = 'output window, operand 0']
    #allocation11 [shape = 'u8[262144]{0}', space=vmem, size = 0x40000, scoped, tag = 'output window, operand 1']
    #allocation12 [shape = 's32[2]{0}', space=sflag, size = 0x8, scoped, tag = 'scoped memory for tpu_custom_call.1']
    #allocation13 [shape = 'u8[262144]{0}', space=vmem, size = 0x40000, scoped, tag = 'output window, operand 2']
    %12 = vsyncpa [#allocation3], 0
    %s13 = scalar_lea.sflag [#allocation3], 1
    %14 = vsyncpa %s13, 0
    %15 = vsyncpa [#allocation6], 0
    %s16 = scalar_lea.sflag [#allocation6], 1
    %17 = vsyncpa %s16, 0
    %18 = vsyncpa [#allocation9], 0
    %19 = vsyncpa [#allocation4], 0
    %s20 = scalar_lea.sflag [#allocation4], 1
    %21 = vsyncpa %s20, 0
    %22 = vsyncpa [#allocation12], 0
    %s23 = scalar_lea.sflag [#allocation12], 1
    %24 = vsyncpa %s23, 0
    loop: start=0, step=1, limit=6
    $region2: #{tpu_custom_call.1} parent=1 // loop_pre_header
      _
    $region3: #{tpu_custom_call.1} parent=1 // loop_header
      %s26 = sphi 0, %s30
      %p27 = scmp.ge.s32.totalorder %s26, 6
      %s33 = sphi 0, %s52
      %s34 = sphi 0, %s48
      %s35 = sphi 0, %s44
      %s36 = sphi 0, %s33
      %s37 = sphi 0, %s34
      %s38 = sphi 0, %s35
      %s39 = sphi 0, %s36
      %s40 = sphi 0, %s37
      %s41 = sphi 0, %s38
      %s57 = sphi 0, %s59
      %s60 = sphi 0, %s57
      %s61 = sphi 0, %s60
      %s77 = sphi 0, %s61
      %s83 = sphi 0, %s85
      %s86 = sphi 0, %s83
      %s87 = sphi 0, %s86
      %s103 = sphi 0, %s87
      %s109 = sphi 0, %s111
      %s112 = sphi 0, %s109
      %s113 = sphi 0, %s112
      %s129 = sphi 0, %s113
      %s135 = sphi 0, %s137
      %s138 = sphi 0, %s135
      %s139 = sphi 0, %s138
      %s155 = sphi 0, %s139
      %s165 = sphi 0, %s167
      %s168 = sphi 0, %s165
      %s169 = sphi 0, %s168
      %s185 = sphi 0, %s169
      %s195 = sphi 0, %s197
      %s198 = sphi 0, %s195
      %s199 = sphi 0, %s198
      %s215 = sphi 0, %s199
      %s225 = sphi 0, %s227
      %s228 = sphi 0, %s225
      %s229 = sphi 0, %s228
      %s245 = sphi 0, %s229
    $region4: #{tpu_custom_call.1} parent=1 // loop_header_branch
      %29 = sbr.rel (%p27) target = $region8
    $region5: #{tpu_custom_call.1} parent=1 // loop_body
      %s31 = ssub.s32 %s26, 1
      %s32 = ssub.s32 %s26, 2
      %s42 = sadd.s32 1, %s35
      %p43 = scmp.ge.s32.totalorder %s42, 2
      %s44 = scalar_select %p43, 0, %s42
      %s45 = sadd.s32 1, %s34
      %s46 = scalar_select %p43, %s45, %s34
      %p47 = scmp.ge.s32.totalorder %s46, 1
      %s48 = scalar_select %p47, 0, %s46
      %s49 = sadd.s32 1, %s33
      %s50 = scalar_select %p47, %s49, %s33
      %p51 = scmp.ge.s32.totalorder %s50, 2
      %s52 = scalar_select %p51, 0, %s50
      %s53 = ssub.s32 %s33, %s52
      %s54 = ssub.s32 %s34, %s48
      %s55 = sor.u32 %s53, %s54
      %p56 = scmp.eq.s32.totalorder %s55, 0
      %s58 = sadd.s32 %s57, 1
      %s59 = scalar_select %p56, %s57, %s58
      %p62 = pneg %p56
      %p63 = scmp.eq.s32.totalorder %s26, 3
      %p64 = por %p62, %p63
      %p65 = scmp.ne.s32.totalorder %s57, %s60
      %p66 = scmp.eq.s32.totalorder %s26, 0
      %p67 = por %p65, %p66
      %p68 = scmp.ne.s32.totalorder %s57, %s60
      %p69 = scmp.eq.s32.totalorder %s31, 3
      %p70 = por %p68, %p69
      %p71 = scmp.ne.s32.totalorder %s60, %s61
      %p72 = scmp.eq.s32.totalorder %s31, 0
      %p73 = por %p71, %p72
      %p74 = scmp.ne.s32.totalorder %s60, %s61
      %p75 = scmp.eq.s32.totalorder %s32, 3
      %p76 = por %p74, %p75
      %p78 = scmp.ne.s32.totalorder %s61, %s77
      %p79 = scmp.eq.s32.totalorder %s32, 0
      %p80 = por %p78, %p79
      %s81 = ssub.s32 %s35, %s44
      %p82 = scmp.eq.s32.totalorder %s81, 0
      %s84 = sadd.s32 %s83, 1
      %s85 = scalar_select %p82, %s83, %s84
      %p88 = pneg %p82
      %p89 = scmp.eq.s32.totalorder %s26, 3
      %p90 = por %p88, %p89
      %p91 = scmp.ne.s32.totalorder %s83, %s86
      %p92 = scmp.eq.s32.totalorder %s26, 0
      %p93 = por %p91, %p92
      %p94 = scmp.ne.s32.totalorder %s83, %s86
      %p95 = scmp.eq.s32.totalorder %s31, 3
      %p96 = por %p94, %p95
      %p97 = scmp.ne.s32.totalorder %s86, %s87
      %p98 = scmp.eq.s32.totalorder %s31, 0
      %p99 = por %p97, %p98
      %p100 = scmp.ne.s32.totalorder %s86, %s87
      %p101 = scmp.eq.s32.totalorder %s32, 3
      %p102 = por %p100, %p101
      %p104 = scmp.ne.s32.totalorder %s87, %s103
      %p105 = scmp.eq.s32.totalorder %s32, 0
      %p106 = por %p104, %p105
      %s107 = ssub.s32 %s34, %s48
      %p108 = scmp.eq.s32.totalorder %s107, 0
      %s110 = sadd.s32 %s109, 1
      %s111 = scalar_select %p108, %s109, %s110
      %p114 = pneg %p108
      %p115 = scmp.eq.s32.totalorder %s26, 3
      %p116 = por %p114, %p115
      %p117 = scmp.ne.s32.totalorder %s109, %s112
      %p118 = scmp.eq.s32.totalorder %s26, 0
      %p119 = por %p117, %p118
      %p120 = scmp.ne.s32.totalorder %s109, %s112
      %p121 = scmp.eq.s32.totalorder %s31, 3
      %p122 = por %p120, %p121
      %p123 = scmp.ne.s32.totalorder %s112, %s113
      %p124 = scmp.eq.s32.totalorder %s31, 0
      %p125 = por %p123, %p124
      %p126 = scmp.ne.s32.totalorder %s112, %s113
      %p127 = scmp.eq.s32.totalorder %s32, 3
      %p128 = por %p126, %p127
      %p130 = scmp.ne.s32.totalorder %s113, %s129
      %p131 = scmp.eq.s32.totalorder %s32, 0
      %p132 = por %p130, %p131
      %s133 = ssub.s32 %s34, %s48
      %p134 = scmp.eq.s32.totalorder %s133, 0
      %s136 = sadd.s32 %s135, 1
      %s137 = scalar_select %p134, %s135, %s136
      %p140 = pneg %p134
      %p141 = scmp.eq.s32.totalorder %s26, 3
      %p142 = por %p140, %p141
      %p143 = scmp.ne.s32.totalorder %s135, %s138
      %p144 = scmp.eq.s32.totalorder %s26, 0
      %p145 = por %p143, %p144
      %p146 = scmp.ne.s32.totalorder %s135, %s138
      %p147 = scmp.eq.s32.totalorder %s31, 3
      %p148 = por %p146, %p147
      %p149 = scmp.ne.s32.totalorder %s138, %s139
      %p150 = scmp.eq.s32.totalorder %s31, 0
      %p151 = por %p149, %p150
      %p152 = scmp.ne.s32.totalorder %s138, %s139
      %p153 = scmp.eq.s32.totalorder %s32, 3
      %p154 = por %p152, %p153
      %p156 = scmp.ne.s32.totalorder %s139, %s155
      %p157 = scmp.eq.s32.totalorder %s32, 0
      %p158 = por %p156, %p157
      %s159 = ssub.s32 %s33, %s52
      %s160 = ssub.s32 %s35, %s44
      %s161 = sor.u32 %s159, %s160
      %s162 = ssub.s32 %s34, %s48
      %s163 = sor.u32 %s161, %s162
      %p164 = scmp.eq.s32.totalorder %s163, 0
      %s166 = sadd.s32 %s165, 1
      %s167 = scalar_select %p164, %s165, %s166
      %p170 = pneg %p164
      %p171 = scmp.eq.s32.totalorder %s26, 3
      %p172 = por %p170, %p171
      %p173 = scmp.ne.s32.totalorder %s165, %s168
      %p174 = scmp.eq.s32.totalorder %s26, 0
      %p175 = por %p173, %p174
      %p176 = scmp.ne.s32.totalorder %s165, %s168
      %p177 = scmp.eq.s32.totalorder %s31, 3
      %p178 = por %p176, %p177
      %p179 = scmp.ne.s32.totalorder %s168, %s169
      %p180 = scmp.eq.s32.totalorder %s31, 0
      %p181 = por %p179, %p180
      %p182 = scmp.ne.s32.totalorder %s168, %s169
      %p183 = scmp.eq.s32.totalorder %s32, 3
      %p184 = por %p182, %p183
      %p186 = scmp.ne.s32.totalorder %s169, %s185
      %p187 = scmp.eq.s32.totalorder %s32, 0
      %p188 = por %p186, %p187
      %s189 = ssub.s32 %s33, %s52
      %s190 = ssub.s32 %s35, %s44
      %s191 = sor.u32 %s189, %s190
      %s192 = ssub.s32 %s34, %s48
      %s193 = sor.u32 %s191, %s192
      %p194 = scmp.eq.s32.totalorder %s193, 0
      %s196 = sadd.s32 %s195, 1
      %s197 = scalar_select %p194, %s195, %s196
      %p200 = pneg %p194
      %p201 = scmp.eq.s32.totalorder %s26, 3
      %p202 = por %p200, %p201
      %p203 = scmp.ne.s32.totalorder %s195, %s198
      %p204 = scmp.eq.s32.totalorder %s26, 0
      %p205 = por %p203, %p204
      %p206 = scmp.ne.s32.totalorder %s195, %s198
      %p207 = scmp.eq.s32.totalorder %s31, 3
      %p208 = por %p206, %p207
      %p209 = scmp.ne.s32.totalorder %s198, %s199
      %p210 = scmp.eq.s32.totalorder %s31, 0
      %p211 = por %p209, %p210
      %p212 = scmp.ne.s32.totalorder %s198, %s199
      %p213 = scmp.eq.s32.totalorder %s32, 3
      %p214 = por %p212, %p213
      %p216 = scmp.ne.s32.totalorder %s199, %s215
      %p217 = scmp.eq.s32.totalorder %s32, 0
      %p218 = por %p216, %p217
      %s219 = ssub.s32 %s33, %s52
      %s220 = ssub.s32 %s35, %s44
      %s221 = sor.u32 %s219, %s220
      %s222 = ssub.s32 %s34, %s48
      %s223 = sor.u32 %s221, %s222
      %p224 = scmp.eq.s32.totalorder %s223, 0
      %s226 = sadd.s32 %s225, 1
      %s227 = scalar_select %p224, %s225, %s226
      %p230 = pneg %p224
      %p231 = scmp.eq.s32.totalorder %s26, 3
      %p232 = por %p230, %p231
      %p233 = scmp.ne.s32.totalorder %s225, %s228
      %p234 = scmp.eq.s32.totalorder %s26, 0
      %p235 = por %p233, %p234
      %p236 = scmp.ne.s32.totalorder %s225, %s228
      %p237 = scmp.eq.s32.totalorder %s31, 3
      %p238 = por %p236, %p237
      %p239 = scmp.ne.s32.totalorder %s228, %s229
      %p240 = scmp.eq.s32.totalorder %s31, 0
      %p241 = por %p239, %p240
      %p242 = scmp.ne.s32.totalorder %s228, %s229
      %p243 = scmp.eq.s32.totalorder %s32, 3
      %p244 = por %p242, %p243
      %p246 = scmp.ne.s32.totalorder %s229, %s245
      %p247 = scmp.eq.s32.totalorder %s32, 0
      %p248 = por %p246, %p247
      %p249 = scmp.le.s32.totalorder 1, %s26
      %p250 = scmp.lt.s32.totalorder %s26, 5
      %p251 = pnand %p249, %p250
      %p252 = pneg %p251
      // Predicated region
      $region9: #{tpu_custom_call.1} parent=5 // pred_check
        _
      $region10: #{tpu_custom_call.1} parent=5 // pred_check_branch
        %254 = sbr.rel (%p251) target = $region12
      $region11: #{tpu_custom_call.1} parent=5 // pred_region
        %s255 = ssub.s32 %s26, 1
        // Predicated region
        $region13: #{tpu_custom_call.1} parent=11 // pred_check
          %p256 = pneg %p125
        $region14: #{tpu_custom_call.1} parent=11 // pred_check_branch
          %258 = sbr.rel (%p256) target = $region16
        $region15: #{tpu_custom_call.1} parent=11 // pred_region
          %s259 = smul.u32 32, %s37
          %261 = vsyncadd [#allocation6], 0
          %s262 = smul.addr %s259, 8
          %s263 = scalar_lea.hbm %s2, %s262
          %s264 = sshll.u32 %s263, 4
          %s265 = int_to_ptr.hbm [resolvable:$true] %s264
          %s266 = sshll.u32 [#allocation7], 4
          %s267 = int_to_ptr.vmem [resolvable:$true] %s266
          %272 = dma.hbm_to_vmem [thread:$0]  %s265, 4096, %s267, [#allocation6], 128, 128, 8
        $region16: #{tpu_custom_call.1} parent=11 // pred_fallthru
          _
        // Predicated region
        $region17: #{tpu_custom_call.1} parent=11 // pred_check
          %p273 = pneg %p151
        $region18: #{tpu_custom_call.1} parent=11 // pred_check_branch
          %275 = sbr.rel (%p273) target = $region20
        $region19: #{tpu_custom_call.1} parent=11 // pred_region
          %s276 = smul.u32 32, %s37
          %278 = vsyncadd [#allocation9], 0
          %s279 = smul.addr %s276, 8
          %s280 = scalar_lea.hbm %s3, %s279
          %s281 = sshll.u32 %s280, 4
          %s282 = int_to_ptr.hbm [resolvable:$true] %s281
          %s283 = sshll.u32 [#allocation8], 4
          %s284 = int_to_ptr.vmem [resolvable:$true] %s283
          %289 = dma.hbm_to_vmem [thread:$0]  %s282, 4096, %s284, [#allocation9], 128, 128, 8
        $region20: #{tpu_custom_call.1} parent=11 // pred_fallthru
          _
      $region12: #{tpu_custom_call.1} parent=5 // pred_fallthru
        _
      %p290 = scmp.lt.s32.totalorder %s26, 4
      // Predicated region
      $region21: #{tpu_custom_call.1} parent=5 // pred_check
        %p291 = pneg %p290
      $region22: #{tpu_custom_call.1} parent=5 // pred_check_branch
        %293 = sbr.rel (%p291) target = $region24
      $region23: #{tpu_custom_call.1} parent=5 // pred_region
        // Predicated region
        $region25: #{tpu_custom_call.1} parent=23 // pred_check
          %p294 = pneg %p67
        $region26: #{tpu_custom_call.1} parent=23 // pred_check_branch
          %296 = sbr.rel (%p294) target = $region28
        $region27: #{tpu_custom_call.1} parent=23 // pred_region
          %s297 = sand.u32 %s57, 1
          %s298 = scalar_lea.sflag [#allocation3], %s297
          %s299 = sand.u32 %s57, 1
          %s300 = smul.addr %s299, 512
          %s301 = scalar_lea.vmem [#allocation2], %s300
          %s302 = smul.u32 32, %s34
          %304 = vsyncadd %s298, 0
          %s305 = smul.addr %s302, 2
          %s306 = smul.addr %s33, 64
          %s307 = sadd.s32 %s305, %s306
          %s308 = smul.addr %s307, 8
          %s309 = scalar_lea.hbm %s0, %s308
          %s310 = sshll.u32 %s309, 4
          %s311 = int_to_ptr.hbm [resolvable:$true] %s310
          %s312 = sshll.u32 %s301, 4
          %s313 = int_to_ptr.vmem [resolvable:$true] %s312
          %318 = dma.hbm_to_vmem [thread:$0]  %s311, 8192, %s313, %s298, 256, 256, 16
        $region28: #{tpu_custom_call.1} parent=23 // pred_fallthru
          _
        // Predicated region
        $region29: #{tpu_custom_call.1} parent=23 // pred_check
          %p319 = pneg %p93
        $region30: #{tpu_custom_call.1} parent=23 // pred_check_branch
          %321 = sbr.rel (%p319) target = $region32
        $region31: #{tpu_custom_call.1} parent=23 // pred_region
          %s322 = sand.u32 %s26, 1
          %s323 = scalar_lea.sflag [#allocation6], %s322
          %s324 = sand.u32 %s83, 1
          %s325 = smul.addr %s324, 384
          %s326 = scalar_lea.vmem [#allocation5], %s325
          %328 = vsyncadd %s323, 0
          %s329 = smul.addr %s35, 96
          %s330 = smul.addr %s329, 4
          %s331 = scalar_lea.hbm %s1, %s330
          %s332 = sshll.u32 %s331, 4
          %s333 = int_to_ptr.hbm [resolvable:$true] %s332
          %s334 = sshll.u32 %s326, 4
          %s335 = int_to_ptr.vmem [resolvable:$true] %s334
          %340 = dma.hbm_to_vmem [thread:$0]  %s333, 6144, %s335, %s323, 192, 192, 12
        $region32: #{tpu_custom_call.1} parent=23 // pred_fallthru
          _
      $region24: #{tpu_custom_call.1} parent=5 // pred_fallthru
        _
      %p341 = scmp.le.s32.totalorder 1, %s26
      %p342 = scmp.lt.s32.totalorder %s26, 5
      %p343 = pnand %p341, %p342
      %p344 = pneg %p343
      // Predicated region
      $region33: #{tpu_custom_call.1} parent=5 // pred_check
        _
      $region34: #{tpu_custom_call.1} parent=5 // pred_check_branch
        %346 = sbr.rel (%p343) target = $region36
      $region35: #{tpu_custom_call.1} parent=5 // pred_region
        %s347 = ssub.s32 %s26, 1
        %s348 = sand.u32 %s60, 1
        %s349 = scalar_lea.sflag [#allocation3], %s348
        %s350 = sand.u32 %s60, 1
        %s351 = smul.addr %s350, 512
        %s352 = scalar_lea.vmem [#allocation2], %s351
        // Predicated region
        $region37: #{tpu_custom_call.1} parent=35 // pred_check
          %p353 = pneg %p73
        $region38: #{tpu_custom_call.1} parent=35 // pred_check_branch
          %355 = sbr.rel (%p353) target = $region40
        $region39: #{tpu_custom_call.1} parent=35 // pred_region
          %357 = dma.done %s349, 8192
        $region40: #{tpu_custom_call.1} parent=35 // pred_fallthru
          _
        %s358 = sand.u32 %s31, 1
        %s359 = scalar_lea.sflag [#allocation6], %s358
        %s360 = sand.u32 %s86, 1
        %s361 = smul.addr %s360, 384
        %s362 = scalar_lea.vmem [#allocation5], %s361
        // Predicated region
        $region41: #{tpu_custom_call.1} parent=35 // pred_check
          %p363 = pneg %p99
        $region42: #{tpu_custom_call.1} parent=35 // pred_check_branch
          %365 = sbr.rel (%p363) target = $region44
        $region43: #{tpu_custom_call.1} parent=35 // pred_region
          %367 = dma.done %s359, 6144
        $region44: #{tpu_custom_call.1} parent=35 // pred_fallthru
          _
        // Predicated region
        $region45: #{tpu_custom_call.1} parent=35 // pred_check
          %p368 = pneg %p125
        $region46: #{tpu_custom_call.1} parent=35 // pred_check_branch
          %370 = sbr.rel (%p368) target = $region48
        $region47: #{tpu_custom_call.1} parent=35 // pred_region
          %372 = dma.done [#allocation6], 4096
        $region48: #{tpu_custom_call.1} parent=35 // pred_fallthru
          _
        // Predicated region
        $region49: #{tpu_custom_call.1} parent=35 // pred_check
          %p373 = pneg %p151
        $region50: #{tpu_custom_call.1} parent=35 // pred_check_branch
          %375 = sbr.rel (%p373) target = $region52
        $region51: #{tpu_custom_call.1} parent=35 // pred_region
          %377 = dma.done [#allocation9], 4096
        $region52: #{tpu_custom_call.1} parent=35 // pred_fallthru
          _
        %s378 = sand.u32 %s60, 1
        %s379 = scalar_lea.sflag [#allocation3], %s378
        %s380 = sand.u32 %s60, 1
        %s381 = smul.addr %s380, 512
        %s382 = scalar_lea.vmem [#allocation2], %s381
        %p383 = pneg %p73
        %p384 = pneg %p70
        %s385 = sand.u32 %s31, 1
        %s386 = scalar_lea.sflag [#allocation6], %s385
        %s387 = sand.u32 %s86, 1
        %s388 = smul.addr %s387, 384
        %s389 = scalar_lea.vmem [#allocation5], %s388
        %p390 = pneg %p99
        %p391 = pneg %p96
        %p392 = pneg %p125
        %p393 = pneg %p122
        %p394 = pneg %p151
        %p395 = pneg %p148
        %p396 = pneg %p181
        %p397 = pneg %p178
        %s398 = sand.u32 %s168, 1
        %s399 = scalar_lea.sflag [#allocation4], %s398
        %s400 = sand.u32 %s168, 1
        %s401 = smul.addr %s400, 256
        %s402 = scalar_lea.vmem [#allocation10], %s401
        %p403 = pneg %p211
        %p404 = pneg %p208
        %s405 = sand.u32 %s31, 1
        %s406 = scalar_lea.sflag [#allocation12], %s405
        %s407 = sand.u32 %s198, 1
        %s408 = smul.addr %s407, 256
        %s409 = scalar_lea.vmem [#allocation11], %s408
        %p410 = pneg %p241
        %p411 = pneg %p238
        %s412 = sand.u32 %s31, 1
        %s413 = scalar_lea.sflag [#allocation12], %s412
        %s414 = sand.u32 %s228, 1
        %s415 = smul.addr %s414, 256
        %s416 = scalar_lea.vmem [#allocation13], %s415
        %s417 = smul.u32 32, %s37
        %s418 = smul.u32 32, %s37
        %s419 = smul.u32 32, %s37
        %s420 = smul.u32 32, %s37
        %s421 = smul.u32 32, %s37
        %s422 = smul.u32 32, %s37
        %v423 = vld [vmem:[%s352] sm:$0xff]
        %v424 = vld [vmem:[%s352 + $0x8] sm:$0xff]
        %v425 = vld [vmem:[%s352 + $0x10] sm:$0xff]
        %v426 = vld [vmem:[%s352 + $0x18] sm:$0xff]
        %v427 = vld [vmem:[%s352 + $0x20] sm:$0xff]
        %v428 = vld [vmem:[%s352 + $0x28] sm:$0xff]
        %v429 = vld [vmem:[%s352 + $0x30] sm:$0xff]
        %v430 = vld [vmem:[%s352 + $0x38] sm:$0xff]
        %v431 = vld [vmem:[%s352 + $0x40] sm:$0xff]
        %v432 = vld [vmem:[%s352 + $0x48] sm:$0xff]
        %v433 = vld [vmem:[%s352 + $0x50] sm:$0xff]
        %v434 = vld [vmem:[%s352 + $0x58] sm:$0xff]
        %v435 = vld [vmem:[%s352 + $0x60] sm:$0xff]
        %v436 = vld [vmem:[%s352 + $0x68] sm:$0xff]
        %v437 = vld [vmem:[%s352 + $0x70] sm:$0xff]
        %v438 = vld [vmem:[%s352 + $0x78] sm:$0xff]
        %v439 = vld [vmem:[%s352 + $0x80] sm:$0xff]
        %v440 = vld [vmem:[%s352 + $0x88] sm:$0xff]
        %v441 = vld [vmem:[%s352 + $0x90] sm:$0xff]
        %v442 = vld [vmem:[%s352 + $0x98] sm:$0xff]
        %v443 = vld [vmem:[%s352 + $0xa0] sm:$0xff]
        %v444 = vld [vmem:[%s352 + $0xa8] sm:$0xff]
        %v445 = vld [vmem:[%s352 + $0xb0] sm:$0xff]
        %v446 = vld [vmem:[%s352 + $0xb8] sm:$0xff]
        %v447 = vld [vmem:[%s352 + $0xc0] sm:$0xff]
        %v448 = vld [vmem:[%s352 + $0xc8] sm:$0xff]
        %v449 = vld [vmem:[%s352 + $0xd0] sm:$0xff]
        %v450 = vld [vmem:[%s352 + $0xd8] sm:$0xff]
        %v451 = vld [vmem:[%s352 + $0xe0] sm:$0xff]
        %v452 = vld [vmem:[%s352 + $0xe8] sm:$0xff]
        %v453 = vld [vmem:[%s352 + $0xf0] sm:$0xff]
        %v454 = vld [vmem:[%s352 + $0xf8] sm:$0xff]
        %v455 = vld [vmem:[%s352 + $0x100] sm:$0xff]
        %v456 = vld [vmem:[%s352 + $0x108] sm:$0xff]
        %v457 = vld [vmem:[%s352 + $0x110] sm:$0xff]
        %v458 = vld [vmem:[%s352 + $0x118] sm:$0xff]
        %v459 = vld [vmem:[%s352 + $0x120] sm:$0xff]
        %v460 = vld [vmem:[%s352 + $0x128] sm:$0xff]
        %v461 = vld [vmem:[%s352 + $0x130] sm:$0xff]
        %v462 = vld [vmem:[%s352 + $0x138] sm:$0xff]
        %v463 = vld [vmem:[%s352 + $0x140] sm:$0xff]
        %v464 = vld [vmem:[%s352 + $0x148] sm:$0xff]
        %v465 = vld [vmem:[%s352 + $0x150] sm:$0xff]
        %v466 = vld [vmem:[%s352 + $0x158] sm:$0xff]
        %v467 = vld [vmem:[%s352 + $0x160] sm:$0xff]
        %v468 = vld [vmem:[%s352 + $0x168] sm:$0xff]
        %v469 = vld [vmem:[%s352 + $0x170] sm:$0xff]
        %v470 = vld [vmem:[%s352 + $0x178] sm:$0xff]
        %v471 = vld [vmem:[%s352 + $0x180] sm:$0xff]
        %v472 = vld [vmem:[%s352 + $0x188] sm:$0xff]
        %v473 = vld [vmem:[%s352 + $0x190] sm:$0xff]
        %v474 = vld [vmem:[%s352 + $0x198] sm:$0xff]
        %v475 = vld [vmem:[%s352 + $0x1a0] sm:$0xff]
        %v476 = vld [vmem:[%s352 + $0x1a8] sm:$0xff]
        %v477 = vld [vmem:[%s352 + $0x1b0] sm:$0xff]
        %v478 = vld [vmem:[%s352 + $0x1b8] sm:$0xff]
        %v479 = vld [vmem:[%s352 + $0x1c0] sm:$0xff]
        %v480 = vld [vmem:[%s352 + $0x1c8] sm:$0xff]
        %v481 = vld [vmem:[%s352 + $0x1d0] sm:$0xff]
        %v482 = vld [vmem:[%s352 + $0x1d8] sm:$0xff]
        %v483 = vld [vmem:[%s352 + $0x1e0] sm:$0xff]
        %v484 = vld [vmem:[%s352 + $0x1e8] sm:$0xff]
        %v485 = vld [vmem:[%s352 + $0x1f0] sm:$0xff]
        %v486 = vld [vmem:[%s352 + $0x1f8] sm:$0xff]
        %v487 = vpack.c.bf16 %v425, %v423
        %v488 = vpack.c.bf16 %v426, %v424
        %v489 = vpack.c.bf16 %v429, %v427
        %v490 = vpack.c.bf16 %v430, %v428
        %v491 = vpack.c.bf16 %v433, %v431
        %v492 = vpack.c.bf16 %v434, %v432
        %v493 = vpack.c.bf16 %v437, %v435
        %v494 = vpack.c.bf16 %v438, %v436
        %v495 = vpack.c.bf16 %v441, %v439
        %v496 = vpack.c.bf16 %v442, %v440
        %v497 = vpack.c.bf16 %v445, %v443
        %v498 = vpack.c.bf16 %v446, %v444
        %v499 = vpack.c.bf16 %v449, %v447
        %v500 = vpack.c.bf16 %v450, %v448
        %v501 = vpack.c.bf16 %v453, %v451
        %v502 = vpack.c.bf16 %v454, %v452
        %v503 = vpack.c.bf16 %v457, %v455
        %v504 = vpack.c.bf16 %v458, %v456
        %v505 = vpack.c.bf16 %v461, %v459
        %v506 = vpack.c.bf16 %v462, %v460
        %v507 = vpack.c.bf16 %v465, %v463
        %v508 = vpack.c.bf16 %v466, %v464
        %v509 = vpack.c.bf16 %v469, %v467
        %v510 = vpack.c.bf16 %v470, %v468
        %v511 = vpack.c.bf16 %v473, %v471
        %v512 = vpack.c.bf16 %v474, %v472
        %v513 = vpack.c.bf16 %v477, %v475
        %v514 = vpack.c.bf16 %v478, %v476
        %v515 = vpack.c.bf16 %v481, %v479
        %v516 = vpack.c.bf16 %v482, %v480
        %v517 = vpack.c.bf16 %v485, %v483
        %v518 = vpack.c.bf16 %v486, %v484
        %v519 = vld [vmem:[%s362] sm:$0xff]
        %v520 = vld [vmem:[%s362 + $0x8] sm:$0xf]
        %v521 = vld [vmem:[%s362 + $0xc] sm:$0xff]
        %v522 = vld [vmem:[%s362 + $0x14] sm:$0xf]
        %v523 = vld [vmem:[%s362 + $0x18] sm:$0xff]
        %v524 = vld [vmem:[%s362 + $0x20] sm:$0xf]
        %v525 = vld [vmem:[%s362 + $0x24] sm:$0xff]
        %v526 = vld [vmem:[%s362 + $0x2c] sm:$0xf]
        %v527 = vld [vmem:[%s362 + $0x30] sm:$0xff]
        %v528 = vld [vmem:[%s362 + $0x38] sm:$0xf]
        %v529 = vld [vmem:[%s362 + $0x3c] sm:$0xff]
        %v530 = vld [vmem:[%s362 + $0x44] sm:$0xf]
        %v531 = vld [vmem:[%s362 + $0x48] sm:$0xff]
        %v532 = vld [vmem:[%s362 + $0x50] sm:$0xf]
        %v533 = vld [vmem:[%s362 + $0x54] sm:$0xff]
        %v534 = vld [vmem:[%s362 + $0x5c] sm:$0xf]
        %v535 = vld [vmem:[%s362 + $0x60] sm:$0xff]
        %v536 = vld [vmem:[%s362 + $0x68] sm:$0xf]
        %v537 = vld [vmem:[%s362 + $0x6c] sm:$0xff]
        %v538 = vld [vmem:[%s362 + $0x74] sm:$0xf]
        %v539 = vld [vmem:[%s362 + $0x78] sm:$0xff]
        %v540 = vld [vmem:[%s362 + $0x80] sm:$0xf]
        %v541 = vld [vmem:[%s362 + $0x84] sm:$0xff]
        %v542 = vld [vmem:[%s362 + $0x8c] sm:$0xf]
        %v543 = vld [vmem:[%s362 + $0x90] sm:$0xff]
        %v544 = vld [vmem:[%s362 + $0x98] sm:$0xf]
        %v545 = vld [vmem:[%s362 + $0x9c] sm:$0xff]
        %v546 = vld [vmem:[%s362 + $0xa4] sm:$0xf]
        %v547 = vld [vmem:[%s362 + $0xa8] sm:$0xff]
        %v548 = vld [vmem:[%s362 + $0xb0] sm:$0xf]
        %v549 = vld [vmem:[%s362 + $0xb4] sm:$0xff]
        %v550 = vld [vmem:[%s362 + $0xbc] sm:$0xf]
        %v551 = vld [vmem:[%s362 + $0xc0] sm:$0xff]
        %v552 = vld [vmem:[%s362 + $0xc8] sm:$0xf]
        %v553 = vld [vmem:[%s362 + $0xcc] sm:$0xff]
        %v554 = vld [vmem:[%s362 + $0xd4] sm:$0xf]
        %v555 = vld [vmem:[%s362 + $0xd8] sm:$0xff]
        %v556 = vld [vmem:[%s362 + $0xe0] sm:$0xf]
        %v557 = vld [vmem:[%s362 + $0xe4] sm:$0xff]
        %v558 = vld [vmem:[%s362 + $0xec] sm:$0xf]
        %v559 = vld [vmem:[%s362 + $0xf0] sm:$0xff]
        %v560 = vld [vmem:[%s362 + $0xf8] sm:$0xf]
        %v561 = vld [vmem:[%s362 + $0xfc] sm:$0xff]
        %v562 = vld [vmem:[%s362 + $0x104] sm:$0xf]
        %v563 = vld [vmem:[%s362 + $0x108] sm:$0xff]
        %v564 = vld [vmem:[%s362 + $0x110] sm:$0xf]
        %v565 = vld [vmem:[%s362 + $0x114] sm:$0xff]
        %v566 = vld [vmem:[%s362 + $0x11c] sm:$0xf]
        %v567 = vld [vmem:[%s362 + $0x120] sm:$0xff]
        %v568 = vld [vmem:[%s362 + $0x128] sm:$0xf]
        %v569 = vld [vmem:[%s362 + $0x12c] sm:$0xff]
        %v570 = vld [vmem:[%s362 + $0x134] sm:$0xf]
        %v571 = vld [vmem:[%s362 + $0x138] sm:$0xff]
        %v572 = vld [vmem:[%s362 + $0x140] sm:$0xf]
        %v573 = vld [vmem:[%s362 + $0x144] sm:$0xff]
        %v574 = vld [vmem:[%s362 + $0x14c] sm:$0xf]
        %v575 = vld [vmem:[%s362 + $0x150] sm:$0xff]
        %v576 = vld [vmem:[%s362 + $0x158] sm:$0xf]
        %v577 = vld [vmem:[%s362 + $0x15c] sm:$0xff]
        %v578 = vld [vmem:[%s362 + $0x164] sm:$0xf]
        %v579 = vld [vmem:[%s362 + $0x168] sm:$0xff]
        %v580 = vld [vmem:[%s362 + $0x170] sm:$0xf]
        %v581 = vld [vmem:[%s362 + $0x174] sm:$0xff]
        %v582 = vld [vmem:[%s362 + $0x17c] sm:$0xf]
        %v647 = vunpack.c.l.b16 %v519
        %v648 = vunpack.c.h.b16 %v519
        %v649 = vunpack.c.l.b16 %v520
        %v650 = vunpack.c.l.b16 %v521
        %v651 = vunpack.c.h.b16 %v521
        %v652 = vunpack.c.l.b16 %v522
        %v653 = vunpack.c.l.b16 %v523
        %v654 = vunpack.c.h.b16 %v523
        %v655 = vunpack.c.l.b16 %v524
        %v656 = vunpack.c.l.b16 %v525
        %v657 = vunpack.c.h.b16 %v525
        %v658 = vunpack.c.l.b16 %v526
        %v659 = vunpack.c.l.b16 %v527
        %v660 = vunpack.c.h.b16 %v527
        %v661 = vunpack.c.l.b16 %v528
        %v662 = vunpack.c.l.b16 %v529
        %v663 = vunpack.c.h.b16 %v529
        %v664 = vunpack.c.l.b16 %v530
        %v665 = vunpack.c.l.b16 %v531
        %v666 = vunpack.c.h.b16 %v531
        %v667 = vunpack.c.l.b16 %v532
        %v668 = vunpack.c.l.b16 %v533
        %v669 = vunpack.c.h.b16 %v533
        %v670 = vunpack.c.l.b16 %v534
        %v671 = vunpack.c.l.b16 %v535
        %v672 = vunpack.c.h.b16 %v535
        %v673 = vunpack.c.l.b16 %v536
        %v674 = vunpack.c.l.b16 %v537
        %v675 = vunpack.c.h.b16 %v537
        %v676 = vunpack.c.l.b16 %v538
        %v677 = vunpack.c.l.b16 %v539
        %v678 = vunpack.c.h.b16 %v539
        %v679 = vunpack.c.l.b16 %v540
        %v680 = vunpack.c.l.b16 %v541
        %v681 = vunpack.c.h.b16 %v541
        %v682 = vunpack.c.l.b16 %v542
        %v683 = vunpack.c.l.b16 %v543
        %v684 = vunpack.c.h.b16 %v543
        %v685 = vunpack.c.l.b16 %v544
        %v686 = vunpack.c.l.b16 %v545
        %v687 = vunpack.c.h.b16 %v545
        %v688 = vunpack.c.l.b16 %v546
        %v689 = vunpack.c.l.b16 %v547
        %v690 = vunpack.c.h.b16 %v547
        %v691 = vunpack.c.l.b16 %v548
        %v692 = vunpack.c.l.b16 %v549
        %v693 = vunpack.c.h.b16 %v549
        %v694 = vunpack.c.l.b16 %v550
        %v695 = vunpack.c.l.b16 %v551
        %v696 = vunpack.c.h.b16 %v551
        %v697 = vunpack.c.l.b16 %v552
        %v698 = vunpack.c.l.b16 %v553
        %v699 = vunpack.c.h.b16 %v553
        %v700 = vunpack.c.l.b16 %v554
        %v701 = vunpack.c.l.b16 %v555
        %v702 = vunpack.c.h.b16 %v555
        %v703 = vunpack.c.l.b16 %v556
        %v704 = vunpack.c.l.b16 %v557
        %v705 = vunpack.c.h.b16 %v557
        %v706 = vunpack.c.l.b16 %v558
        %v707 = vunpack.c.l.b16 %v559
        %v708 = vunpack.c.h.b16 %v559
        %v709 = vunpack.c.l.b16 %v560
        %v710 = vunpack.c.l.b16 %v561
        %v711 = vunpack.c.h.b16 %v561
        %v712 = vunpack.c.l.b16 %v562
        %v713 = vunpack.c.l.b16 %v563
        %v714 = vunpack.c.h.b16 %v563
        %v715 = vunpack.c.l.b16 %v564
        %v716 = vunpack.c.l.b16 %v565
        %v717 = vunpack.c.h.b16 %v565
        %v718 = vunpack.c.l.b16 %v566
        %v719 = vunpack.c.l.b16 %v567
        %v720 = vunpack.c.h.b16 %v567
        %v721 = vunpack.c.l.b16 %v568
        %v722 = vunpack.c.l.b16 %v569
        %v723 = vunpack.c.h.b16 %v569
        %v724 = vunpack.c.l.b16 %v570
        %v725 = vunpack.c.l.b16 %v571
        %v726 = vunpack.c.h.b16 %v571
        %v727 = vunpack.c.l.b16 %v572
        %v728 = vunpack.c.l.b16 %v573
        %v729 = vunpack.c.h.b16 %v573
        %v730 = vunpack.c.l.b16 %v574
        %v731 = vunpack.c.l.b16 %v575
        %v732 = vunpack.c.h.b16 %v575
        %v733 = vunpack.c.l.b16 %v576
        %v734 = vunpack.c.l.b16 %v577
        %v735 = vunpack.c.h.b16 %v577
        %v736 = vunpack.c.l.b16 %v578
        %v737 = vunpack.c.l.b16 %v579
        %v738 = vunpack.c.h.b16 %v579
        %v739 = vunpack.c.l.b16 %v580
        %v740 = vunpack.c.l.b16 %v581
        %v741 = vunpack.c.h.b16 %v581
        %v742 = vunpack.c.l.b16 %v582
        %v743 = vpack.c.b16 %v650, %v647
        %v744 = vpack.c.b16 %v651, %v648
        %v745 = vpack.c.b16 %v652, %v649
        %v746 = vpack.c.b16 %v656, %v653
        %v747 = vpack.c.b16 %v657, %v654
        %v748 = vpack.c.b16 %v658, %v655
        %v749 = vpack.c.b16 %v662, %v659
        %v750 = vpack.c.b16 %v663, %v660
        %v751 = vpack.c.b16 %v664, %v661
        %v752 = vpack.c.b16 %v668, %v665
        %v753 = vpack.c.b16 %v669, %v666
        %v754 = vpack.c.b16 %v670, %v667
        %v755 = vpack.c.b16 %v674, %v671
        %v756 = vpack.c.b16 %v675, %v672
        %v757 = vpack.c.b16 %v676, %v673
        %v758 = vpack.c.b16 %v680, %v677
        %v759 = vpack.c.b16 %v681, %v678
        %v760 = vpack.c.b16 %v682, %v679
        %v761 = vpack.c.b16 %v686, %v683
        %v762 = vpack.c.b16 %v687, %v684
        %v763 = vpack.c.b16 %v688, %v685
        %v764 = vpack.c.b16 %v692, %v689
        %v765 = vpack.c.b16 %v693, %v690
        %v766 = vpack.c.b16 %v694, %v691
        %v767 = vpack.c.b16 %v698, %v695
        %v768 = vpack.c.b16 %v699, %v696
        %v769 = vpack.c.b16 %v700, %v697
        %v770 = vpack.c.b16 %v704, %v701
        %v771 = vpack.c.b16 %v705, %v702
        %v772 = vpack.c.b16 %v706, %v703
        %v773 = vpack.c.b16 %v710, %v707
        %v774 = vpack.c.b16 %v711, %v708
        %v775 = vpack.c.b16 %v712, %v709
        %v776 = vpack.c.b16 %v716, %v713
        %v777 = vpack.c.b16 %v717, %v714
        %v778 = vpack.c.b16 %v718, %v715
        %v779 = vpack.c.b16 %v722, %v719
        %v780 = vpack.c.b16 %v723, %v720
        %v781 = vpack.c.b16 %v724, %v721
        %v782 = vpack.c.b16 %v728, %v725
        %v783 = vpack.c.b16 %v729, %v726
        %v784 = vpack.c.b16 %v730, %v727
        %v785 = vpack.c.b16 %v734, %v731
        %v786 = vpack.c.b16 %v735, %v732
        %v787 = vpack.c.b16 %v736, %v733
        %v788 = vpack.c.b16 %v740, %v737
        %v789 = vpack.c.b16 %v741, %v738
        %v790 = vpack.c.b16 %v742, %v739
        %839 = vmatpush.bf16.msra.mxu0 %v764
        %840 = vmatpush.bf16.msra.mxu0 %v761
        %841 = vmatpush.bf16.msra.mxu0 %v758
        %842 = vmatpush.bf16.msra.mxu0 %v755
        %843 = vmatpush.bf16.msra.mxu0 %v752
        %844 = vmatpush.bf16.msra.mxu0 %v749
        %845 = vmatpush.bf16.msra.mxu0 %v746
        %846 = vmatpush.bf16.msra.mxu0 %v743
        %847 = vmatmul.bf16.gmra.mxu0 %v487
        %v848 = vpop.f32.mrf.mxu0
        %v849 = vadd.f32 0.0, %v848
        %v850 = vpop.f32.mrf.mxu0
        %v851 = vadd.f32 0.0, %v850
        %852 = vmatmul.bf16.gmra.mxu0 %v489
        %v853 = vpop.f32.mrf.mxu0
        %v854 = vadd.f32 0.0, %v853
        %v855 = vpop.f32.mrf.mxu0
        %v856 = vadd.f32 0.0, %v855
        %857 = vmatmul.bf16.gmra.mxu0 %v491
        %v858 = vpop.f32.mrf.mxu0
        %v859 = vadd.f32 0.0, %v858
        %v860 = vpop.f32.mrf.mxu0
        %v861 = vadd.f32 0.0, %v860
        %862 = vmatmul.bf16.gmra.mxu0 %v493
        %v863 = vpop.f32.mrf.mxu0
        %v864 = vadd.f32 0.0, %v863
        %v865 = vpop.f32.mrf.mxu0
        %v866 = vadd.f32 0.0, %v865
        %867 = vmatmul.bf16.gmra.mxu0 %v495
        %v868 = vpop.f32.mrf.mxu0
        %v869 = vadd.f32 0.0, %v868
        %v870 = vpop.f32.mrf.mxu0
        %v871 = vadd.f32 0.0, %v870
        %872 = vmatmul.bf16.gmra.mxu0 %v497
        %v873 = vpop.f32.mrf.mxu0
        %v874 = vadd.f32 0.0, %v873
        %v875 = vpop.f32.mrf.mxu0
        %v876 = vadd.f32 0.0, %v875
        %877 = vmatmul.bf16.gmra.mxu0 %v499
        %v878 = vpop.f32.mrf.mxu0
        %v879 = vadd.f32 0.0, %v878
        %v880 = vpop.f32.mrf.mxu0
        %v881 = vadd.f32 0.0, %v880
        %882 = vmatmul.bf16.gmra.mxu0 %v501
        %v883 = vpop.f32.mrf.mxu0
        %v884 = vadd.f32 0.0, %v883
        %v885 = vpop.f32.mrf.mxu0
        %v886 = vadd.f32 0.0, %v885
        %887 = vmatmul.bf16.gmra.mxu0 %v503
        %v888 = vpop.f32.mrf.mxu0
        %v889 = vadd.f32 0.0, %v888
        %v890 = vpop.f32.mrf.mxu0
        %v891 = vadd.f32 0.0, %v890
        %892 = vmatmul.bf16.gmra.mxu0 %v505
        %v893 = vpop.f32.mrf.mxu0
        %v894 = vadd.f32 0.0, %v893
        %v895 = vpop.f32.mrf.mxu0
        %v896 = vadd.f32 0.0, %v895
        %897 = vmatmul.bf16.gmra.mxu0 %v507
        %v898 = vpop.f32.mrf.mxu0
        %v899 = vadd.f32 0.0, %v898
        %v900 = vpop.f32.mrf.mxu0
        %v901 = vadd.f32 0.0, %v900
        %902 = vmatmul.bf16.gmra.mxu0 %v509
        %v903 = vpop.f32.mrf.mxu0
        %v904 = vadd.f32 0.0, %v903
        %v905 = vpop.f32.mrf.mxu0
        %v906 = vadd.f32 0.0, %v905
        %907 = vmatmul.bf16.gmra.mxu0 %v511
        %v908 = vpop.f32.mrf.mxu0
        %v909 = vadd.f32 0.0, %v908
        %v910 = vpop.f32.mrf.mxu0
        %v911 = vadd.f32 0.0, %v910
        %912 = vmatmul.bf16.gmra.mxu0 %v513
        %v913 = vpop.f32.mrf.mxu0
        %v914 = vadd.f32 0.0, %v913
        %v915 = vpop.f32.mrf.mxu0
        %v916 = vadd.f32 0.0, %v915
        %917 = vmatmul.bf16.gmra.mxu0 %v515
        %v918 = vpop.f32.mrf.mxu0
        %v919 = vadd.f32 0.0, %v918
        %v920 = vpop.f32.mrf.mxu0
        %v921 = vadd.f32 0.0, %v920
        %922 = vmatmul.bf16.gmra.mxu0 %v517
        %v923 = vpop.f32.mrf.mxu0
        %v924 = vadd.f32 0.0, %v923
        %v925 = vpop.f32.mrf.mxu0
        %v926 = vadd.f32 0.0, %v925
        %927 = vdwg.mxu0
        %928 = vmatpush.bf16.msra.mxu0 %v788
        %929 = vmatpush.bf16.msra.mxu0 %v785
        %930 = vmatpush.bf16.msra.mxu0 %v782
        %931 = vmatpush.bf16.msra.mxu0 %v779
        %932 = vmatpush.bf16.msra.mxu0 %v776
        %933 = vmatpush.bf16.msra.mxu0 %v773
        %934 = vmatpush.bf16.msra.mxu0 %v770
        %935 = vmatpush.bf16.msra.mxu0 %v767
        %936 = vmatmul.bf16.gmra.mxu0 %v488
        %v937 = vpop.f32.mrf.mxu0
        %v938 = vadd.f32 %v849, %v937
        %v939 = vpop.f32.mrf.mxu0
        %v940 = vadd.f32 %v851, %v939
        %941 = vmatmul.bf16.gmra.mxu0 %v490
        %v942 = vpop.f32.mrf.mxu0
        %v943 = vadd.f32 %v854, %v942
        %v944 = vpop.f32.mrf.mxu0
        %v945 = vadd.f32 %v856, %v944
        %946 = vmatmul.bf16.gmra.mxu0 %v492
        %v947 = vpop.f32.mrf.mxu0
        %v948 = vadd.f32 %v859, %v947
        %v949 = vpop.f32.mrf.mxu0
        %v950 = vadd.f32 %v861, %v949
        %951 = vmatmul.bf16.gmra.mxu0 %v494
        %v952 = vpop.f32.mrf.mxu0
        %v953 = vadd.f32 %v864, %v952
        %v954 = vpop.f32.mrf.mxu0
        %v955 = vadd.f32 %v866, %v954
        %956 = vmatmul.bf16.gmra.mxu0 %v496
        %v957 = vpop.f32.mrf.mxu0
        %v958 = vadd.f32 %v869, %v957
        %v959 = vpop.f32.mrf.mxu0
        %v960 = vadd.f32 %v871, %v959
        %961 = vmatmul.bf16.gmra.mxu0 %v498
        %v962 = vpop.f32.mrf.mxu0
        %v963 = vadd.f32 %v874, %v962
        %v964 = vpop.f32.mrf.mxu0
        %v965 = vadd.f32 %v876, %v964
        %966 = vmatmul.bf16.gmra.mxu0 %v500
        %v967 = vpop.f32.mrf.mxu0
        %v968 = vadd.f32 %v879, %v967
        %v969 = vpop.f32.mrf.mxu0
        %v970 = vadd.f32 %v881, %v969
        %971 = vmatmul.bf16.gmra.mxu0 %v502
        %v972 = vpop.f32.mrf.mxu0
        %v973 = vadd.f32 %v884, %v972
        %v974 = vpop.f32.mrf.mxu0
        %v975 = vadd.f32 %v886, %v974
        %976 = vmatmul.bf16.gmra.mxu0 %v504
        %v977 = vpop.f32.mrf.mxu0
        %v978 = vadd.f32 %v889, %v977
        %v979 = vpop.f32.mrf.mxu0
        %v980 = vadd.f32 %v891, %v979
        %981 = vmatmul.bf16.gmra.mxu0 %v506
        %v982 = vpop.f32.mrf.mxu0
        %v983 = vadd.f32 %v894, %v982
        %v984 = vpop.f32.mrf.mxu0
        %v985 = vadd.f32 %v896, %v984
        %986 = vmatmul.bf16.gmra.mxu0 %v508
        %v987 = vpop.f32.mrf.mxu0
        %v988 = vadd.f32 %v899, %v987
        %v989 = vpop.f32.mrf.mxu0
        %v990 = vadd.f32 %v901, %v989
        %991 = vmatmul.bf16.gmra.mxu0 %v510
        %v992 = vpop.f32.mrf.mxu0
        %v993 = vadd.f32 %v904, %v992
        %v994 = vpop.f32.mrf.mxu0
        %v995 = vadd.f32 %v906, %v994
        %996 = vmatmul.bf16.gmra.mxu0 %v512
        %v997 = vpop.f32.mrf.mxu0
        %v998 = vadd.f32 %v909, %v997
        %v999 = vpop.f32.mrf.mxu0
        %v1000 = vadd.f32 %v911, %v999
        %1001 = vmatmul.bf16.gmra.mxu0 %v514
        %v1002 = vpop.f32.mrf.mxu0
        %v1003 = vadd.f32 %v914, %v1002
        %v1004 = vpop.f32.mrf.mxu0
        %v1005 = vadd.f32 %v916, %v1004
        %1006 = vmatmul.bf16.gmra.mxu0 %v516
        %v1007 = vpop.f32.mrf.mxu0
        %v1008 = vadd.f32 %v919, %v1007
        %v1009 = vpop.f32.mrf.mxu0
        %v1010 = vadd.f32 %v921, %v1009
        %1011 = vmatmul.bf16.gmra.mxu0 %v518
        %v1012 = vpop.f32.mrf.mxu0
        %v1013 = vadd.f32 %v924, %v1012
        %v1014 = vpop.f32.mrf.mxu0
        %v1015 = vadd.f32 %v926, %v1014
        %1016 = vdwg.mxu0
        %1017 = vmatpush.bf16.msra.mxu0 %v765
        %1018 = vmatpush.bf16.msra.mxu0 %v762
        %1019 = vmatpush.bf16.msra.mxu0 %v759
        %1020 = vmatpush.bf16.msra.mxu0 %v756
        %1021 = vmatpush.bf16.msra.mxu0 %v753
        %1022 = vmatpush.bf16.msra.mxu0 %v750
        %1023 = vmatpush.bf16.msra.mxu0 %v747
        %1024 = vmatpush.bf16.msra.mxu0 %v744
        %1025 = vmatmul.bf16.gmra.mxu0 %v487
        %v1026 = vpop.f32.mrf.mxu0
        %v1027 = vadd.f32 0.0, %v1026
        %v1028 = vpop.f32.mrf.mxu0
        %v1029 = vadd.f32 0.0, %v1028
        %1030 = vmatmul.bf16.gmra.mxu0 %v489
        %v1031 = vpop.f32.mrf.mxu0
        %v1032 = vadd.f32 0.0, %v1031
        %v1033 = vpop.f32.mrf.mxu0
        %v1034 = vadd.f32 0.0, %v1033
        %1035 = vmatmul.bf16.gmra.mxu0 %v491
        %v1036 = vpop.f32.mrf.mxu0
        %v1037 = vadd.f32 0.0, %v1036
        %v1038 = vpop.f32.mrf.mxu0
        %v1039 = vadd.f32 0.0, %v1038
        %1040 = vmatmul.bf16.gmra.mxu0 %v493
        %v1041 = vpop.f32.mrf.mxu0
        %v1042 = vadd.f32 0.0, %v1041
        %v1043 = vpop.f32.mrf.mxu0
        %v1044 = vadd.f32 0.0, %v1043
        %1045 = vmatmul.bf16.gmra.mxu0 %v495
        %v1046 = vpop.f32.mrf.mxu0
        %v1047 = vadd.f32 0.0, %v1046
        %v1048 = vpop.f32.mrf.mxu0
        %v1049 = vadd.f32 0.0, %v1048
        %1050 = vmatmul.bf16.gmra.mxu0 %v497
        %v1051 = vpop.f32.mrf.mxu0
        %v1052 = vadd.f32 0.0, %v1051
        %v1053 = vpop.f32.mrf.mxu0
        %v1054 = vadd.f32 0.0, %v1053
        %1055 = vmatmul.bf16.gmra.mxu0 %v499
        %v1056 = vpop.f32.mrf.mxu0
        %v1057 = vadd.f32 0.0, %v1056
        %v1058 = vpop.f32.mrf.mxu0
        %v1059 = vadd.f32 0.0, %v1058
        %1060 = vmatmul.bf16.gmra.mxu0 %v501
        %v1061 = vpop.f32.mrf.mxu0
        %v1062 = vadd.f32 0.0, %v1061
        %v1063 = vpop.f32.mrf.mxu0
        %v1064 = vadd.f32 0.0, %v1063
        %1065 = vmatmul.bf16.gmra.mxu0 %v503
        %v1066 = vpop.f32.mrf.mxu0
        %v1067 = vadd.f32 0.0, %v1066
        %v1068 = vpop.f32.mrf.mxu0
        %v1069 = vadd.f32 0.0, %v1068
        %1070 = vmatmul.bf16.gmra.mxu0 %v505
        %v1071 = vpop.f32.mrf.mxu0
        %v1072 = vadd.f32 0.0, %v1071
        %v1073 = vpop.f32.mrf.mxu0
        %v1074 = vadd.f32 0.0, %v1073
        %1075 = vmatmul.bf16.gmra.mxu0 %v507
        %v1076 = vpop.f32.mrf.mxu0
        %v1077 = vadd.f32 0.0, %v1076
        %v1078 = vpop.f32.mrf.mxu0
        %v1079 = vadd.f32 0.0, %v1078
        %1080 = vmatmul.bf16.gmra.mxu0 %v509
        %v1081 = vpop.f32.mrf.mxu0
        %v1082 = vadd.f32 0.0, %v1081
        %v1083 = vpop.f32.mrf.mxu0
        %v1084 = vadd.f32 0.0, %v1083
        %1085 = vmatmul.bf16.gmra.mxu0 %v511
        %v1086 = vpop.f32.mrf.mxu0
        %v1087 = vadd.f32 0.0, %v1086
        %v1088 = vpop.f32.mrf.mxu0
        %v1089 = vadd.f32 0.0, %v1088
        %1090 = vmatmul.bf16.gmra.mxu0 %v513
        %v1091 = vpop.f32.mrf.mxu0
        %v1092 = vadd.f32 0.0, %v1091
        %v1093 = vpop.f32.mrf.mxu0
        %v1094 = vadd.f32 0.0, %v1093
        %1095 = vmatmul.bf16.gmra.mxu0 %v515
        %v1096 = vpop.f32.mrf.mxu0
        %v1097 = vadd.f32 0.0, %v1096
        %v1098 = vpop.f32.mrf.mxu0
        %v1099 = vadd.f32 0.0, %v1098
        %1100 = vmatmul.bf16.gmra.mxu0 %v517
        %v1101 = vpop.f32.mrf.mxu0
        %v1102 = vadd.f32 0.0, %v1101
        %v1103 = vpop.f32.mrf.mxu0
        %v1104 = vadd.f32 0.0, %v1103
        %1105 = vdwg.mxu0
        %1106 = vmatpush.bf16.msra.mxu0 %v789
        %1107 = vmatpush.bf16.msra.mxu0 %v786
        %1108 = vmatpush.bf16.msra.mxu0 %v783
        %1109 = vmatpush.bf16.msra.mxu0 %v780
        %1110 = vmatpush.bf16.msra.mxu0 %v777
        %1111 = vmatpush.bf16.msra.mxu0 %v774
        %1112 = vmatpush.bf16.msra.mxu0 %v771
        %1113 = vmatpush.bf16.msra.mxu0 %v768
        %1114 = vmatmul.bf16.gmra.mxu0 %v488
        %v1115 = vpop.f32.mrf.mxu0
        %v1116 = vadd.f32 %v1027, %v1115
        %v1117 = vpop.f32.mrf.mxu0
        %v1118 = vadd.f32 %v1029, %v1117
        %1119 = vmatmul.bf16.gmra.mxu0 %v490
        %v1120 = vpop.f32.mrf.mxu0
        %v1121 = vadd.f32 %v1032, %v1120
        %v1122 = vpop.f32.mrf.mxu0
        %v1123 = vadd.f32 %v1034, %v1122
        %1124 = vmatmul.bf16.gmra.mxu0 %v492
        %v1125 = vpop.f32.mrf.mxu0
        %v1126 = vadd.f32 %v1037, %v1125
        %v1127 = vpop.f32.mrf.mxu0
        %v1128 = vadd.f32 %v1039, %v1127
        %1129 = vmatmul.bf16.gmra.mxu0 %v494
        %v1130 = vpop.f32.mrf.mxu0
        %v1131 = vadd.f32 %v1042, %v1130
        %v1132 = vpop.f32.mrf.mxu0
        %v1133 = vadd.f32 %v1044, %v1132
        %1134 = vmatmul.bf16.gmra.mxu0 %v496
        %v1135 = vpop.f32.mrf.mxu0
        %v1136 = vadd.f32 %v1047, %v1135
        %v1137 = vpop.f32.mrf.mxu0
        %v1138 = vadd.f32 %v1049, %v1137
        %1139 = vmatmul.bf16.gmra.mxu0 %v498
        %v1140 = vpop.f32.mrf.mxu0
        %v1141 = vadd.f32 %v1052, %v1140
        %v1142 = vpop.f32.mrf.mxu0
        %v1143 = vadd.f32 %v1054, %v1142
        %1144 = vmatmul.bf16.gmra.mxu0 %v500
        %v1145 = vpop.f32.mrf.mxu0
        %v1146 = vadd.f32 %v1057, %v1145
        %v1147 = vpop.f32.mrf.mxu0
        %v1148 = vadd.f32 %v1059, %v1147
        %1149 = vmatmul.bf16.gmra.mxu0 %v502
        %v1150 = vpop.f32.mrf.mxu0
        %v1151 = vadd.f32 %v1062, %v1150
        %v1152 = vpop.f32.mrf.mxu0
        %v1153 = vadd.f32 %v1064, %v1152
        %1154 = vmatmul.bf16.gmra.mxu0 %v504
        %v1155 = vpop.f32.mrf.mxu0
        %v1156 = vadd.f32 %v1067, %v1155
        %v1157 = vpop.f32.mrf.mxu0
        %v1158 = vadd.f32 %v1069, %v1157
        %1159 = vmatmul.bf16.gmra.mxu0 %v506
        %v1160 = vpop.f32.mrf.mxu0
        %v1161 = vadd.f32 %v1072, %v1160
        %v1162 = vpop.f32.mrf.mxu0
        %v1163 = vadd.f32 %v1074, %v1162
        %1164 = vmatmul.bf16.gmra.mxu0 %v508
        %v1165 = vpop.f32.mrf.mxu0
        %v1166 = vadd.f32 %v1077, %v1165
        %v1167 = vpop.f32.mrf.mxu0
        %v1168 = vadd.f32 %v1079, %v1167
        %1169 = vmatmul.bf16.gmra.mxu0 %v510
        %v1170 = vpop.f32.mrf.mxu0
        %v1171 = vadd.f32 %v1082, %v1170
        %v1172 = vpop.f32.mrf.mxu0
        %v1173 = vadd.f32 %v1084, %v1172
        %1174 = vmatmul.bf16.gmra.mxu0 %v512
        %v1175 = vpop.f32.mrf.mxu0
        %v1176 = vadd.f32 %v1087, %v1175
        %v1177 = vpop.f32.mrf.mxu0
        %v1178 = vadd.f32 %v1089, %v1177
        %1179 = vmatmul.bf16.gmra.mxu0 %v514
        %v1180 = vpop.f32.mrf.mxu0
        %v1181 = vadd.f32 %v1092, %v1180
        %v1182 = vpop.f32.mrf.mxu0
        %v1183 = vadd.f32 %v1094, %v1182
        %1184 = vmatmul.bf16.gmra.mxu0 %v516
        %v1185 = vpop.f32.mrf.mxu0
        %v1186 = vadd.f32 %v1097, %v1185
        %v1187 = vpop.f32.mrf.mxu0
        %v1188 = vadd.f32 %v1099, %v1187
        %1189 = vmatmul.bf16.gmra.mxu0 %v518
        %v1190 = vpop.f32.mrf.mxu0
        %v1191 = vadd.f32 %v1102, %v1190
        %v1192 = vpop.f32.mrf.mxu0
        %v1193 = vadd.f32 %v1104, %v1192
        %1194 = vdwg.mxu0
        %1195 = vmatpush.bf16.msra.mxu0 %v766
        %1196 = vmatpush.bf16.msra.mxu0 %v763
        %1197 = vmatpush.bf16.msra.mxu0 %v760
        %1198 = vmatpush.bf16.msra.mxu0 %v757
        %1199 = vmatpush.bf16.msra.mxu0 %v754
        %1200 = vmatpush.bf16.msra.mxu0 %v751
        %1201 = vmatpush.bf16.msra.mxu0 %v748
        %1202 = vmatpush.bf16.msra.mxu0 %v745
        %1203 = vmatmul.bf16.gmra.mxu0 %v487
        %v1204 = vpop.f32.mrf.mxu0
        %v1205 = vadd.f32 0.0, %v1204
        %v1206 = vpop.f32.mrf.mxu0
        %v1207 = vadd.f32 0.0, %v1206
        %1208 = vmatmul.bf16.gmra.mxu0 %v489
        %v1209 = vpop.f32.mrf.mxu0
        %v1210 = vadd.f32 0.0, %v1209
        %v1211 = vpop.f32.mrf.mxu0
        %v1212 = vadd.f32 0.0, %v1211
        %1213 = vmatmul.bf16.gmra.mxu0 %v491
        %v1214 = vpop.f32.mrf.mxu0
        %v1215 = vadd.f32 0.0, %v1214
        %v1216 = vpop.f32.mrf.mxu0
        %v1217 = vadd.f32 0.0, %v1216
        %1218 = vmatmul.bf16.gmra.mxu0 %v493
        %v1219 = vpop.f32.mrf.mxu0
        %v1220 = vadd.f32 0.0, %v1219
        %v1221 = vpop.f32.mrf.mxu0
        %v1222 = vadd.f32 0.0, %v1221
        %1223 = vmatmul.bf16.gmra.mxu0 %v495
        %v1224 = vpop.f32.mrf.mxu0
        %v1225 = vadd.f32 0.0, %v1224
        %v1226 = vpop.f32.mrf.mxu0
        %v1227 = vadd.f32 0.0, %v1226
        %1228 = vmatmul.bf16.gmra.mxu0 %v497
        %v1229 = vpop.f32.mrf.mxu0
        %v1230 = vadd.f32 0.0, %v1229
        %v1231 = vpop.f32.mrf.mxu0
        %v1232 = vadd.f32 0.0, %v1231
        %1233 = vmatmul.bf16.gmra.mxu0 %v499
        %v1234 = vpop.f32.mrf.mxu0
        %v1235 = vadd.f32 0.0, %v1234
        %v1236 = vpop.f32.mrf.mxu0
        %v1237 = vadd.f32 0.0, %v1236
        %1238 = vmatmul.bf16.gmra.mxu0 %v501
        %v1239 = vpop.f32.mrf.mxu0
        %v1240 = vadd.f32 0.0, %v1239
        %v1241 = vpop.f32.mrf.mxu0
        %v1242 = vadd.f32 0.0, %v1241
        %1243 = vmatmul.bf16.gmra.mxu0 %v503
        %v1244 = vpop.f32.mrf.mxu0
        %v1245 = vadd.f32 0.0, %v1244
        %v1246 = vpop.f32.mrf.mxu0
        %v1247 = vadd.f32 0.0, %v1246
        %1248 = vmatmul.bf16.gmra.mxu0 %v505
        %v1249 = vpop.f32.mrf.mxu0
        %v1250 = vadd.f32 0.0, %v1249
        %v1251 = vpop.f32.mrf.mxu0
        %v1252 = vadd.f32 0.0, %v1251
        %1253 = vmatmul.bf16.gmra.mxu0 %v507
        %v1254 = vpop.f32.mrf.mxu0
        %v1255 = vadd.f32 0.0, %v1254
        %v1256 = vpop.f32.mrf.mxu0
        %v1257 = vadd.f32 0.0, %v1256
        %1258 = vmatmul.bf16.gmra.mxu0 %v509
        %v1259 = vpop.f32.mrf.mxu0
        %v1260 = vadd.f32 0.0, %v1259
        %v1261 = vpop.f32.mrf.mxu0
        %v1262 = vadd.f32 0.0, %v1261
        %1263 = vmatmul.bf16.gmra.mxu0 %v511
        %v1264 = vpop.f32.mrf.mxu0
        %v1265 = vadd.f32 0.0, %v1264
        %v1266 = vpop.f32.mrf.mxu0
        %v1267 = vadd.f32 0.0, %v1266
        %1268 = vmatmul.bf16.gmra.mxu0 %v513
        %v1269 = vpop.f32.mrf.mxu0
        %v1270 = vadd.f32 0.0, %v1269
        %v1271 = vpop.f32.mrf.mxu0
        %v1272 = vadd.f32 0.0, %v1271
        %1273 = vmatmul.bf16.gmra.mxu0 %v515
        %v1274 = vpop.f32.mrf.mxu0
        %v1275 = vadd.f32 0.0, %v1274
        %v1276 = vpop.f32.mrf.mxu0
        %v1277 = vadd.f32 0.0, %v1276
        %1278 = vmatmul.bf16.gmra.mxu0 %v517
        %v1279 = vpop.f32.mrf.mxu0
        %v1280 = vadd.f32 0.0, %v1279
        %v1281 = vpop.f32.mrf.mxu0
        %v1282 = vadd.f32 0.0, %v1281
        %1283 = vdwg.mxu0
        %1284 = vmatpush.bf16.msra.mxu0 %v790
        %1285 = vmatpush.bf16.msra.mxu0 %v787
        %1286 = vmatpush.bf16.msra.mxu0 %v784
        %1287 = vmatpush.bf16.msra.mxu0 %v781
        %1288 = vmatpush.bf16.msra.mxu0 %v778
        %1289 = vmatpush.bf16.msra.mxu0 %v775
        %1290 = vmatpush.bf16.msra.mxu0 %v772
        %1291 = vmatpush.bf16.msra.mxu0 %v769
        %1292 = vmatmul.bf16.gmra.mxu0 %v488
        %v1293 = vpop.f32.mrf.mxu0
        %v1294 = vadd.f32 %v1205, %v1293
        %v1295 = vpop.f32.mrf.mxu0
        %v1296 = vadd.f32 %v1207, %v1295
        %1297 = vmatmul.bf16.gmra.mxu0 %v490
        %v1298 = vpop.f32.mrf.mxu0
        %v1299 = vadd.f32 %v1210, %v1298
        %v1300 = vpop.f32.mrf.mxu0
        %v1301 = vadd.f32 %v1212, %v1300
        %1302 = vmatmul.bf16.gmra.mxu0 %v492
        %v1303 = vpop.f32.mrf.mxu0
        %v1304 = vadd.f32 %v1215, %v1303
        %v1305 = vpop.f32.mrf.mxu0
        %v1306 = vadd.f32 %v1217, %v1305
        %1307 = vmatmul.bf16.gmra.mxu0 %v494
        %v1308 = vpop.f32.mrf.mxu0
        %v1309 = vadd.f32 %v1220, %v1308
        %v1310 = vpop.f32.mrf.mxu0
        %v1311 = vadd.f32 %v1222, %v1310
        %1312 = vmatmul.bf16.gmra.mxu0 %v496
        %v1313 = vpop.f32.mrf.mxu0
        %v1314 = vadd.f32 %v1225, %v1313
        %v1315 = vpop.f32.mrf.mxu0
        %v1316 = vadd.f32 %v1227, %v1315
        %1317 = vmatmul.bf16.gmra.mxu0 %v498
        %v1318 = vpop.f32.mrf.mxu0
        %v1319 = vadd.f32 %v1230, %v1318
        %v1320 = vpop.f32.mrf.mxu0
        %v1321 = vadd.f32 %v1232, %v1320
        %1322 = vmatmul.bf16.gmra.mxu0 %v500
        %v1323 = vpop.f32.mrf.mxu0
        %v1324 = vadd.f32 %v1235, %v1323
        %v1325 = vpop.f32.mrf.mxu0
        %v1326 = vadd.f32 %v1237, %v1325
        %1327 = vmatmul.bf16.gmra.mxu0 %v502
        %v1328 = vpop.f32.mrf.mxu0
        %v1329 = vadd.f32 %v1240, %v1328
        %v1330 = vpop.f32.mrf.mxu0
        %v1331 = vadd.f32 %v1242, %v1330
        %1332 = vmatmul.bf16.gmra.mxu0 %v504
        %v1333 = vpop.f32.mrf.mxu0
        %v1334 = vadd.f32 %v1245, %v1333
        %v1335 = vpop.f32.mrf.mxu0
        %v1336 = vadd.f32 %v1247, %v1335
        %1337 = vmatmul.bf16.gmra.mxu0 %v506
        %v1338 = vpop.f32.mrf.mxu0
        %v1339 = vadd.f32 %v1250, %v1338
        %v1340 = vpop.f32.mrf.mxu0
        %v1341 = vadd.f32 %v1252, %v1340
        %1342 = vmatmul.bf16.gmra.mxu0 %v508
        %v1343 = vpop.f32.mrf.mxu0
        %v1344 = vadd.f32 %v1255, %v1343
        %v1345 = vpop.f32.mrf.mxu0
        %v1346 = vadd.f32 %v1257, %v1345
        %1347 = vmatmul.bf16.gmra.mxu0 %v510
        %v1348 = vpop.f32.mrf.mxu0
        %v1349 = vadd.f32 %v1260, %v1348
        %v1350 = vpop.f32.mrf.mxu0
        %v1351 = vadd.f32 %v1262, %v1350
        %1352 = vmatmul.bf16.gmra.mxu0 %v512
        %v1353 = vpop.f32.mrf.mxu0
        %v1354 = vadd.f32 %v1265, %v1353
        %v1355 = vpop.f32.mrf.mxu0
        %v1356 = vadd.f32 %v1267, %v1355
        %1357 = vmatmul.bf16.gmra.mxu0 %v514
        %v1358 = vpop.f32.mrf.mxu0
        %v1359 = vadd.f32 %v1270, %v1358
        %v1360 = vpop.f32.mrf.mxu0
        %v1361 = vadd.f32 %v1272, %v1360
        %1362 = vmatmul.bf16.gmra.mxu0 %v516
        %v1363 = vpop.f32.mrf.mxu0
        %v1364 = vadd.f32 %v1275, %v1363
        %v1365 = vpop.f32.mrf.mxu0
        %v1366 = vadd.f32 %v1277, %v1365
        %1367 = vmatmul.bf16.gmra.mxu0 %v518
        %v1368 = vpop.f32.mrf.mxu0
        %v1369 = vadd.f32 %v1280, %v1368
        %v1370 = vpop.f32.mrf.mxu0
        %v1371 = vadd.f32 %v1282, %v1370
        %1372 = vdwg.mxu0
        %v1373 = vld [vmem:[#allocation7] sm:$0xff]
        %v1374 = vld [vmem:[#allocation7 + $0x8] sm:$0xff]
        %v1375 = vld [vmem:[#allocation7 + $0x10] sm:$0xff]
        %v1376 = vld [vmem:[#allocation7 + $0x18] sm:$0xff]
        %v1377 = vld [vmem:[#allocation7 + $0x20] sm:$0xff]
        %v1378 = vld [vmem:[#allocation7 + $0x28] sm:$0xff]
        %v1379 = vld [vmem:[#allocation7 + $0x30] sm:$0xff]
        %v1380 = vld [vmem:[#allocation7 + $0x38] sm:$0xff]
        %v1381 = vld [vmem:[#allocation7 + $0x40] sm:$0xff]
        %v1382 = vld [vmem:[#allocation7 + $0x48] sm:$0xff]
        %v1383 = vld [vmem:[#allocation7 + $0x50] sm:$0xff]
        %v1384 = vld [vmem:[#allocation7 + $0x58] sm:$0xff]
        %v1385 = vld [vmem:[#allocation7 + $0x60] sm:$0xff]
        %v1386 = vld [vmem:[#allocation7 + $0x68] sm:$0xff]
        %v1387 = vld [vmem:[#allocation7 + $0x70] sm:$0xff]
        %v1388 = vld [vmem:[#allocation7 + $0x78] sm:$0xff]
        %v1389 = vld [vmem:[#allocation7 + $0x80] sm:$0xff]
        %v1390 = vld [vmem:[#allocation7 + $0x88] sm:$0xff]
        %v1391 = vld [vmem:[#allocation7 + $0x90] sm:$0xff]
        %v1392 = vld [vmem:[#allocation7 + $0x98] sm:$0xff]
        %v1393 = vld [vmem:[#allocation7 + $0xa0] sm:$0xff]
        %v1394 = vld [vmem:[#allocation7 + $0xa8] sm:$0xff]
        %v1395 = vld [vmem:[#allocation7 + $0xb0] sm:$0xff]
        %v1396 = vld [vmem:[#allocation7 + $0xb8] sm:$0xff]
        %v1397 = vld [vmem:[#allocation7 + $0xc0] sm:$0xff]
        %v1398 = vld [vmem:[#allocation7 + $0xc8] sm:$0xff]
        %v1399 = vld [vmem:[#allocation7 + $0xd0] sm:$0xff]
        %v1400 = vld [vmem:[#allocation7 + $0xd8] sm:$0xff]
        %v1401 = vld [vmem:[#allocation7 + $0xe0] sm:$0xff]
        %v1402 = vld [vmem:[#allocation7 + $0xe8] sm:$0xff]
        %v1403 = vld [vmem:[#allocation7 + $0xf0] sm:$0xff]
        %v1404 = vld [vmem:[#allocation7 + $0xf8] sm:$0xff]
        %v1405 = vld [vmem:[#allocation8] sm:$0xff]
        %v1406 = vld [vmem:[#allocation8 + $0x8] sm:$0xff]
        %v1407 = vld [vmem:[#allocation8 + $0x10] sm:$0xff]
        %v1408 = vld [vmem:[#allocation8 + $0x18] sm:$0xff]
        %v1409 = vld [vmem:[#allocation8 + $0x20] sm:$0xff]
        %v1410 = vld [vmem:[#allocation8 + $0x28] sm:$0xff]
        %v1411 = vld [vmem:[#allocation8 + $0x30] sm:$0xff]
        %v1412 = vld [vmem:[#allocation8 + $0x38] sm:$0xff]
        %v1413 = vld [vmem:[#allocation8 + $0x40] sm:$0xff]
        %v1414 = vld [vmem:[#allocation8 + $0x48] sm:$0xff]
        %v1415 = vld [vmem:[#allocation8 + $0x50] sm:$0xff]
        %v1416 = vld [vmem:[#allocation8 + $0x58] sm:$0xff]
        %v1417 = vld [vmem:[#allocation8 + $0x60] sm:$0xff]
        %v1418 = vld [vmem:[#allocation8 + $0x68] sm:$0xff]
        %v1419 = vld [vmem:[#allocation8 + $0x70] sm:$0xff]
        %v1420 = vld [vmem:[#allocation8 + $0x78] sm:$0xff]
        %v1421 = vld [vmem:[#allocation8 + $0x80] sm:$0xff]
        %v1422 = vld [vmem:[#allocation8 + $0x88] sm:$0xff]
        %v1423 = vld [vmem:[#allocation8 + $0x90] sm:$0xff]
        %v1424 = vld [vmem:[#allocation8 + $0x98] sm:$0xff]
        %v1425 = vld [vmem:[#allocation8 + $0xa0] sm:$0xff]
        %v1426 = vld [vmem:[#allocation8 + $0xa8] sm:$0xff]
        %v1427 = vld [vmem:[#allocation8 + $0xb0] sm:$0xff]
        %v1428 = vld [vmem:[#allocation8 + $0xb8] sm:$0xff]
        %v1429 = vld [vmem:[#allocation8 + $0xc0] sm:$0xff]
        %v1430 = vld [vmem:[#allocation8 + $0xc8] sm:$0xff]
        %v1431 = vld [vmem:[#allocation8 + $0xd0] sm:$0xff]
        %v1432 = vld [vmem:[#allocation8 + $0xd8] sm:$0xff]
        %v1433 = vld [vmem:[#allocation8 + $0xe0] sm:$0xff]
        %v1434 = vld [vmem:[#allocation8 + $0xe8] sm:$0xff]
        %v1435 = vld [vmem:[#allocation8 + $0xf0] sm:$0xff]
        %v1436 = vld [vmem:[#allocation8 + $0xf8] sm:$0xff]
        %v1437 = vmul.f32 %v938, %v1373
        %v1438 = vmul.f32 %v940, %v1374
        %v1439 = vmul.f32 %v943, %v1375
        %v1440 = vmul.f32 %v945, %v1376
        %v1441 = vmul.f32 %v948, %v1377
        %v1442 = vmul.f32 %v950, %v1378
        %v1443 = vmul.f32 %v953, %v1379
        %v1444 = vmul.f32 %v955, %v1380
        %v1445 = vmul.f32 %v958, %v1381
        %v1446 = vmul.f32 %v960, %v1382
        %v1447 = vmul.f32 %v963, %v1383
        %v1448 = vmul.f32 %v965, %v1384
        %v1449 = vmul.f32 %v968, %v1385
        %v1450 = vmul.f32 %v970, %v1386
        %v1451 = vmul.f32 %v973, %v1387
        %v1452 = vmul.f32 %v975, %v1388
        %v1453 = vmul.f32 %v978, %v1389
        %v1454 = vmul.f32 %v980, %v1390
        %v1455 = vmul.f32 %v983, %v1391
        %v1456 = vmul.f32 %v985, %v1392
        %v1457 = vmul.f32 %v988, %v1393
        %v1458 = vmul.f32 %v990, %v1394
        %v1459 = vmul.f32 %v993, %v1395
        %v1460 = vmul.f32 %v995, %v1396
        %v1461 = vmul.f32 %v998, %v1397
        %v1462 = vmul.f32 %v1000, %v1398
        %v1463 = vmul.f32 %v1003, %v1399
        %v1464 = vmul.f32 %v1005, %v1400
        %v1465 = vmul.f32 %v1008, %v1401
        %v1466 = vmul.f32 %v1010, %v1402
        %v1467 = vmul.f32 %v1013, %v1403
        %v1468 = vmul.f32 %v1015, %v1404
        %1469 = vrot.lane.b32.xlu0 %v938, 64
        %v1470 = vpop.permute.xlu0 %1469
        %1471 = vrot.lane.b32.xlu0 %v940, 64
        %v1472 = vpop.permute.xlu0 %1471
        %1473 = vrot.lane.b32.xlu0 %v943, 64
        %v1474 = vpop.permute.xlu0 %1473
        %1475 = vrot.lane.b32.xlu0 %v945, 64
        %v1476 = vpop.permute.xlu0 %1475
        %1477 = vrot.lane.b32.xlu0 %v948, 64
        %v1478 = vpop.permute.xlu0 %1477
        %1479 = vrot.lane.b32.xlu0 %v950, 64
        %v1480 = vpop.permute.xlu0 %1479
        %1481 = vrot.lane.b32.xlu0 %v953, 64
        %v1482 = vpop.permute.xlu0 %1481
        %1483 = vrot.lane.b32.xlu0 %v955, 64
        %v1484 = vpop.permute.xlu0 %1483
        %1485 = vrot.lane.b32.xlu0 %v958, 64
        %v1486 = vpop.permute.xlu0 %1485
        %1487 = vrot.lane.b32.xlu0 %v960, 64
        %v1488 = vpop.permute.xlu0 %1487
        %1489 = vrot.lane.b32.xlu0 %v963, 64
        %v1490 = vpop.permute.xlu0 %1489
        %1491 = vrot.lane.b32.xlu0 %v965, 64
        %v1492 = vpop.permute.xlu0 %1491
        %1493 = vrot.lane.b32.xlu0 %v968, 64
        %v1494 = vpop.permute.xlu0 %1493
        %1495 = vrot.lane.b32.xlu0 %v970, 64
        %v1496 = vpop.permute.xlu0 %1495
        %1497 = vrot.lane.b32.xlu0 %v973, 64
        %v1498 = vpop.permute.xlu0 %1497
        %1499 = vrot.lane.b32.xlu0 %v975, 64
        %v1500 = vpop.permute.xlu0 %1499
        %1501 = vrot.lane.b32.xlu0 %v978, 64
        %v1502 = vpop.permute.xlu0 %1501
        %1503 = vrot.lane.b32.xlu0 %v980, 64
        %v1504 = vpop.permute.xlu0 %1503
        %1505 = vrot.lane.b32.xlu0 %v983, 64
        %v1506 = vpop.permute.xlu0 %1505
        %1507 = vrot.lane.b32.xlu0 %v985, 64
        %v1508 = vpop.permute.xlu0 %1507
        %1509 = vrot.lane.b32.xlu0 %v988, 64
        %v1510 = vpop.permute.xlu0 %1509
        %1511 = vrot.lane.b32.xlu0 %v990, 64
        %v1512 = vpop.permute.xlu0 %1511
        %1513 = vrot.lane.b32.xlu0 %v993, 64
        %v1514 = vpop.permute.xlu0 %1513
        %1515 = vrot.lane.b32.xlu0 %v995, 64
        %v1516 = vpop.permute.xlu0 %1515
        %1517 = vrot.lane.b32.xlu0 %v998, 64
        %v1518 = vpop.permute.xlu0 %1517
        %1519 = vrot.lane.b32.xlu0 %v1000, 64
        %v1520 = vpop.permute.xlu0 %1519
        %1521 = vrot.lane.b32.xlu0 %v1003, 64
        %v1522 = vpop.permute.xlu0 %1521
        %1523 = vrot.lane.b32.xlu0 %v1005, 64
        %v1524 = vpop.permute.xlu0 %1523
        %1525 = vrot.lane.b32.xlu0 %v1008, 64
        %v1526 = vpop.permute.xlu0 %1525
        %1527 = vrot.lane.b32.xlu0 %v1010, 64
        %v1528 = vpop.permute.xlu0 %1527
        %1529 = vrot.lane.b32.xlu0 %v1013, 64
        %v1530 = vpop.permute.xlu0 %1529
        %1531 = vrot.lane.b32.xlu0 %v1015, 64
        %v1532 = vpop.permute.xlu0 %1531
        %v1533 = vmul.f32 %v1470, %v1405
        %v1534 = vmul.f32 %v1472, %v1406
        %v1535 = vmul.f32 %v1474, %v1407
        %v1536 = vmul.f32 %v1476, %v1408
        %v1537 = vmul.f32 %v1478, %v1409
        %v1538 = vmul.f32 %v1480, %v1410
        %v1539 = vmul.f32 %v1482, %v1411
        %v1540 = vmul.f32 %v1484, %v1412
        %v1541 = vmul.f32 %v1486, %v1413
        %v1542 = vmul.f32 %v1488, %v1414
        %v1543 = vmul.f32 %v1490, %v1415
        %v1544 = vmul.f32 %v1492, %v1416
        %v1545 = vmul.f32 %v1494, %v1417
        %v1546 = vmul.f32 %v1496, %v1418
        %v1547 = vmul.f32 %v1498, %v1419
        %v1548 = vmul.f32 %v1500, %v1420
        %v1549 = vmul.f32 %v1502, %v1421
        %v1550 = vmul.f32 %v1504, %v1422
        %v1551 = vmul.f32 %v1506, %v1423
        %v1552 = vmul.f32 %v1508, %v1424
        %v1553 = vmul.f32 %v1510, %v1425
        %v1554 = vmul.f32 %v1512, %v1426
        %v1555 = vmul.f32 %v1514, %v1427
        %v1556 = vmul.f32 %v1516, %v1428
        %v1557 = vmul.f32 %v1518, %v1429
        %v1558 = vmul.f32 %v1520, %v1430
        %v1559 = vmul.f32 %v1522, %v1431
        %v1560 = vmul.f32 %v1524, %v1432
        %v1561 = vmul.f32 %v1526, %v1433
        %v1562 = vmul.f32 %v1528, %v1434
        %v1563 = vmul.f32 %v1530, %v1435
        %v1564 = vmul.f32 %v1532, %v1436
        %v1565 = vadd.f32 %v1437, %v1533
        %v1566 = vadd.f32 %v1438, %v1534
        %v1567 = vadd.f32 %v1439, %v1535
        %v1568 = vadd.f32 %v1440, %v1536
        %v1569 = vadd.f32 %v1441, %v1537
        %v1570 = vadd.f32 %v1442, %v1538
        %v1571 = vadd.f32 %v1443, %v1539
        %v1572 = vadd.f32 %v1444, %v1540
        %v1573 = vadd.f32 %v1445, %v1541
        %v1574 = vadd.f32 %v1446, %v1542
        %v1575 = vadd.f32 %v1447, %v1543
        %v1576 = vadd.f32 %v1448, %v1544
        %v1577 = vadd.f32 %v1449, %v1545
        %v1578 = vadd.f32 %v1450, %v1546
        %v1579 = vadd.f32 %v1451, %v1547
        %v1580 = vadd.f32 %v1452, %v1548
        %v1581 = vadd.f32 %v1453, %v1549
        %v1582 = vadd.f32 %v1454, %v1550
        %v1583 = vadd.f32 %v1455, %v1551
        %v1584 = vadd.f32 %v1456, %v1552
        %v1585 = vadd.f32 %v1457, %v1553
        %v1586 = vadd.f32 %v1458, %v1554
        %v1587 = vadd.f32 %v1459, %v1555
        %v1588 = vadd.f32 %v1460, %v1556
        %v1589 = vadd.f32 %v1461, %v1557
        %v1590 = vadd.f32 %v1462, %v1558
        %v1591 = vadd.f32 %v1463, %v1559
        %v1592 = vadd.f32 %v1464, %v1560
        %v1593 = vadd.f32 %v1465, %v1561
        %v1594 = vadd.f32 %v1466, %v1562
        %v1595 = vadd.f32 %v1467, %v1563
        %v1596 = vadd.f32 %v1468, %v1564
        %1597 = vst [vmem:[%s402] sm:$0xff] %v1565
        %1598 = vst [vmem:[%s402 + $0x8] sm:$0xff] %v1566
        %1599 = vst [vmem:[%s402 + $0x10] sm:$0xff] %v1567
        %1600 = vst [vmem:[%s402 + $0x18] sm:$0xff] %v1568
        %1601 = vst [vmem:[%s402 + $0x20] sm:$0xff] %v1569
        %1602 = vst [vmem:[%s402 + $0x28] sm:$0xff] %v1570
        %1603 = vst [vmem:[%s402 + $0x30] sm:$0xff] %v1571
        %1604 = vst [vmem:[%s402 + $0x38] sm:$0xff] %v1572
        %1605 = vst [vmem:[%s402 + $0x40] sm:$0xff] %v1573
        %1606 = vst [vmem:[%s402 + $0x48] sm:$0xff] %v1574
        %1607 = vst [vmem:[%s402 + $0x50] sm:$0xff] %v1575
        %1608 = vst [vmem:[%s402 + $0x58] sm:$0xff] %v1576
        %1609 = vst [vmem:[%s402 + $0x60] sm:$0xff] %v1577
        %1610 = vst [vmem:[%s402 + $0x68] sm:$0xff] %v1578
        %1611 = vst [vmem:[%s402 + $0x70] sm:$0xff] %v1579
        %1612 = vst [vmem:[%s402 + $0x78] sm:$0xff] %v1580
        %1613 = vst [vmem:[%s402 + $0x80] sm:$0xff] %v1581
        %1614 = vst [vmem:[%s402 + $0x88] sm:$0xff] %v1582
        %1615 = vst [vmem:[%s402 + $0x90] sm:$0xff] %v1583
        %1616 = vst [vmem:[%s402 + $0x98] sm:$0xff] %v1584
        %1617 = vst [vmem:[%s402 + $0xa0] sm:$0xff] %v1585
        %1618 = vst [vmem:[%s402 + $0xa8] sm:$0xff] %v1586
        %1619 = vst [vmem:[%s402 + $0xb0] sm:$0xff] %v1587
        %1620 = vst [vmem:[%s402 + $0xb8] sm:$0xff] %v1588
        %1621 = vst [vmem:[%s402 + $0xc0] sm:$0xff] %v1589
        %1622 = vst [vmem:[%s402 + $0xc8] sm:$0xff] %v1590
        %1623 = vst [vmem:[%s402 + $0xd0] sm:$0xff] %v1591
        %1624 = vst [vmem:[%s402 + $0xd8] sm:$0xff] %v1592
        %1625 = vst [vmem:[%s402 + $0xe0] sm:$0xff] %v1593
        %1626 = vst [vmem:[%s402 + $0xe8] sm:$0xff] %v1594
        %1627 = vst [vmem:[%s402 + $0xf0] sm:$0xff] %v1595
        %1628 = vst [vmem:[%s402 + $0xf8] sm:$0xff] %v1596
        %v1629 = vmul.f32 %v1116, %v1373
        %v1630 = vmul.f32 %v1118, %v1374
        %v1631 = vmul.f32 %v1121, %v1375
        %v1632 = vmul.f32 %v1123, %v1376
        %v1633 = vmul.f32 %v1126, %v1377
        %v1634 = vmul.f32 %v1128, %v1378
        %v1635 = vmul.f32 %v1131, %v1379
        %v1636 = vmul.f32 %v1133, %v1380
        %v1637 = vmul.f32 %v1136, %v1381
        %v1638 = vmul.f32 %v1138, %v1382
        %v1639 = vmul.f32 %v1141, %v1383
        %v1640 = vmul.f32 %v1143, %v1384
        %v1641 = vmul.f32 %v1146, %v1385
        %v1642 = vmul.f32 %v1148, %v1386
        %v1643 = vmul.f32 %v1151, %v1387
        %v1644 = vmul.f32 %v1153, %v1388
        %v1645 = vmul.f32 %v1156, %v1389
        %v1646 = vmul.f32 %v1158, %v1390
        %v1647 = vmul.f32 %v1161, %v1391
        %v1648 = vmul.f32 %v1163, %v1392
        %v1649 = vmul.f32 %v1166, %v1393
        %v1650 = vmul.f32 %v1168, %v1394
        %v1651 = vmul.f32 %v1171, %v1395
        %v1652 = vmul.f32 %v1173, %v1396
        %v1653 = vmul.f32 %v1176, %v1397
        %v1654 = vmul.f32 %v1178, %v1398
        %v1655 = vmul.f32 %v1181, %v1399
        %v1656 = vmul.f32 %v1183, %v1400
        %v1657 = vmul.f32 %v1186, %v1401
        %v1658 = vmul.f32 %v1188, %v1402
        %v1659 = vmul.f32 %v1191, %v1403
        %v1660 = vmul.f32 %v1193, %v1404
        %1661 = vrot.lane.b32.xlu0 %v1116, 64
        %v1662 = vpop.permute.xlu0 %1661
        %1663 = vrot.lane.b32.xlu0 %v1118, 64
        %v1664 = vpop.permute.xlu0 %1663
        %1665 = vrot.lane.b32.xlu0 %v1121, 64
        %v1666 = vpop.permute.xlu0 %1665
        %1667 = vrot.lane.b32.xlu0 %v1123, 64
        %v1668 = vpop.permute.xlu0 %1667
        %1669 = vrot.lane.b32.xlu0 %v1126, 64
        %v1670 = vpop.permute.xlu0 %1669
        %1671 = vrot.lane.b32.xlu0 %v1128, 64
        %v1672 = vpop.permute.xlu0 %1671
        %1673 = vrot.lane.b32.xlu0 %v1131, 64
        %v1674 = vpop.permute.xlu0 %1673
        %1675 = vrot.lane.b32.xlu0 %v1133, 64
        %v1676 = vpop.permute.xlu0 %1675
        %1677 = vrot.lane.b32.xlu0 %v1136, 64
        %v1678 = vpop.permute.xlu0 %1677
        %1679 = vrot.lane.b32.xlu0 %v1138, 64
        %v1680 = vpop.permute.xlu0 %1679
        %1681 = vrot.lane.b32.xlu0 %v1141, 64
        %v1682 = vpop.permute.xlu0 %1681
        %1683 = vrot.lane.b32.xlu0 %v1143, 64
        %v1684 = vpop.permute.xlu0 %1683
        %1685 = vrot.lane.b32.xlu0 %v1146, 64
        %v1686 = vpop.permute.xlu0 %1685
        %1687 = vrot.lane.b32.xlu0 %v1148, 64
        %v1688 = vpop.permute.xlu0 %1687
        %1689 = vrot.lane.b32.xlu0 %v1151, 64
        %v1690 = vpop.permute.xlu0 %1689
        %1691 = vrot.lane.b32.xlu0 %v1153, 64
        %v1692 = vpop.permute.xlu0 %1691
        %1693 = vrot.lane.b32.xlu0 %v1156, 64
        %v1694 = vpop.permute.xlu0 %1693
        %1695 = vrot.lane.b32.xlu0 %v1158, 64
        %v1696 = vpop.permute.xlu0 %1695
        %1697 = vrot.lane.b32.xlu0 %v1161, 64
        %v1698 = vpop.permute.xlu0 %1697
        %1699 = vrot.lane.b32.xlu0 %v1163, 64
        %v1700 = vpop.permute.xlu0 %1699
        %1701 = vrot.lane.b32.xlu0 %v1166, 64
        %v1702 = vpop.permute.xlu0 %1701
        %1703 = vrot.lane.b32.xlu0 %v1168, 64
        %v1704 = vpop.permute.xlu0 %1703
        %1705 = vrot.lane.b32.xlu0 %v1171, 64
        %v1706 = vpop.permute.xlu0 %1705
        %1707 = vrot.lane.b32.xlu0 %v1173, 64
        %v1708 = vpop.permute.xlu0 %1707
        %1709 = vrot.lane.b32.xlu0 %v1176, 64
        %v1710 = vpop.permute.xlu0 %1709
        %1711 = vrot.lane.b32.xlu0 %v1178, 64
        %v1712 = vpop.permute.xlu0 %1711
        %1713 = vrot.lane.b32.xlu0 %v1181, 64
        %v1714 = vpop.permute.xlu0 %1713
        %1715 = vrot.lane.b32.xlu0 %v1183, 64
        %v1716 = vpop.permute.xlu0 %1715
        %1717 = vrot.lane.b32.xlu0 %v1186, 64
        %v1718 = vpop.permute.xlu0 %1717
        %1719 = vrot.lane.b32.xlu0 %v1188, 64
        %v1720 = vpop.permute.xlu0 %1719
        %1721 = vrot.lane.b32.xlu0 %v1191, 64
        %v1722 = vpop.permute.xlu0 %1721
        %1723 = vrot.lane.b32.xlu0 %v1193, 64
        %v1724 = vpop.permute.xlu0 %1723
        %v1725 = vmul.f32 %v1662, %v1405
        %v1726 = vmul.f32 %v1664, %v1406
        %v1727 = vmul.f32 %v1666, %v1407
        %v1728 = vmul.f32 %v1668, %v1408
        %v1729 = vmul.f32 %v1670, %v1409
        %v1730 = vmul.f32 %v1672, %v1410
        %v1731 = vmul.f32 %v1674, %v1411
        %v1732 = vmul.f32 %v1676, %v1412
        %v1733 = vmul.f32 %v1678, %v1413
        %v1734 = vmul.f32 %v1680, %v1414
        %v1735 = vmul.f32 %v1682, %v1415
        %v1736 = vmul.f32 %v1684, %v1416
        %v1737 = vmul.f32 %v1686, %v1417
        %v1738 = vmul.f32 %v1688, %v1418
        %v1739 = vmul.f32 %v1690, %v1419
        %v1740 = vmul.f32 %v1692, %v1420
        %v1741 = vmul.f32 %v1694, %v1421
        %v1742 = vmul.f32 %v1696, %v1422
        %v1743 = vmul.f32 %v1698, %v1423
        %v1744 = vmul.f32 %v1700, %v1424
        %v1745 = vmul.f32 %v1702, %v1425
        %v1746 = vmul.f32 %v1704, %v1426
        %v1747 = vmul.f32 %v1706, %v1427
        %v1748 = vmul.f32 %v1708, %v1428
        %v1749 = vmul.f32 %v1710, %v1429
        %v1750 = vmul.f32 %v1712, %v1430
        %v1751 = vmul.f32 %v1714, %v1431
        %v1752 = vmul.f32 %v1716, %v1432
        %v1753 = vmul.f32 %v1718, %v1433
        %v1754 = vmul.f32 %v1720, %v1434
        %v1755 = vmul.f32 %v1722, %v1435
        %v1756 = vmul.f32 %v1724, %v1436
        %v1757 = vadd.f32 %v1629, %v1725
        %v1758 = vadd.f32 %v1630, %v1726
        %v1759 = vadd.f32 %v1631, %v1727
        %v1760 = vadd.f32 %v1632, %v1728
        %v1761 = vadd.f32 %v1633, %v1729
        %v1762 = vadd.f32 %v1634, %v1730
        %v1763 = vadd.f32 %v1635, %v1731
        %v1764 = vadd.f32 %v1636, %v1732
        %v1765 = vadd.f32 %v1637, %v1733
        %v1766 = vadd.f32 %v1638, %v1734
        %v1767 = vadd.f32 %v1639, %v1735
        %v1768 = vadd.f32 %v1640, %v1736
        %v1769 = vadd.f32 %v1641, %v1737
        %v1770 = vadd.f32 %v1642, %v1738
        %v1771 = vadd.f32 %v1643, %v1739
        %v1772 = vadd.f32 %v1644, %v1740
        %v1773 = vadd.f32 %v1645, %v1741
        %v1774 = vadd.f32 %v1646, %v1742
        %v1775 = vadd.f32 %v1647, %v1743
        %v1776 = vadd.f32 %v1648, %v1744
        %v1777 = vadd.f32 %v1649, %v1745
        %v1778 = vadd.f32 %v1650, %v1746
        %v1779 = vadd.f32 %v1651, %v1747
        %v1780 = vadd.f32 %v1652, %v1748
        %v1781 = vadd.f32 %v1653, %v1749
        %v1782 = vadd.f32 %v1654, %v1750
        %v1783 = vadd.f32 %v1655, %v1751
        %v1784 = vadd.f32 %v1656, %v1752
        %v1785 = vadd.f32 %v1657, %v1753
        %v1786 = vadd.f32 %v1658, %v1754
        %v1787 = vadd.f32 %v1659, %v1755
        %v1788 = vadd.f32 %v1660, %v1756
        %1789 = vst [vmem:[%s409] sm:$0xff] %v1757
        %1790 = vst [vmem:[%s409 + $0x8] sm:$0xff] %v1758
        %1791 = vst [vmem:[%s409 + $0x10] sm:$0xff] %v1759
        %1792 = vst [vmem:[%s409 + $0x18] sm:$0xff] %v1760
        %1793 = vst [vmem:[%s409 + $0x20] sm:$0xff] %v1761
        %1794 = vst [vmem:[%s409 + $0x28] sm:$0xff] %v1762
        %1795 = vst [vmem:[%s409 + $0x30] sm:$0xff] %v1763
        %1796 = vst [vmem:[%s409 + $0x38] sm:$0xff] %v1764
        %1797 = vst [vmem:[%s409 + $0x40] sm:$0xff] %v1765
        %1798 = vst [vmem:[%s409 + $0x48] sm:$0xff] %v1766
        %1799 = vst [vmem:[%s409 + $0x50] sm:$0xff] %v1767
        %1800 = vst [vmem:[%s409 + $0x58] sm:$0xff] %v1768
        %1801 = vst [vmem:[%s409 + $0x60] sm:$0xff] %v1769
        %1802 = vst [vmem:[%s409 + $0x68] sm:$0xff] %v1770
        %1803 = vst [vmem:[%s409 + $0x70] sm:$0xff] %v1771
        %1804 = vst [vmem:[%s409 + $0x78] sm:$0xff] %v1772
        %1805 = vst [vmem:[%s409 + $0x80] sm:$0xff] %v1773
        %1806 = vst [vmem:[%s409 + $0x88] sm:$0xff] %v1774
        %1807 = vst [vmem:[%s409 + $0x90] sm:$0xff] %v1775
        %1808 = vst [vmem:[%s409 + $0x98] sm:$0xff] %v1776
        %1809 = vst [vmem:[%s409 + $0xa0] sm:$0xff] %v1777
        %1810 = vst [vmem:[%s409 + $0xa8] sm:$0xff] %v1778
        %1811 = vst [vmem:[%s409 + $0xb0] sm:$0xff] %v1779
        %1812 = vst [vmem:[%s409 + $0xb8] sm:$0xff] %v1780
        %1813 = vst [vmem:[%s409 + $0xc0] sm:$0xff] %v1781
        %1814 = vst [vmem:[%s409 + $0xc8] sm:$0xff] %v1782
        %1815 = vst [vmem:[%s409 + $0xd0] sm:$0xff] %v1783
        %1816 = vst [vmem:[%s409 + $0xd8] sm:$0xff] %v1784
        %1817 = vst [vmem:[%s409 + $0xe0] sm:$0xff] %v1785
        %1818 = vst [vmem:[%s409 + $0xe8] sm:$0xff] %v1786
        %1819 = vst [vmem:[%s409 + $0xf0] sm:$0xff] %v1787
        %1820 = vst [vmem:[%s409 + $0xf8] sm:$0xff] %v1788
        %1821 = vst [vmem:[%s416] sm:$0xff] %v1294
        %1822 = vst [vmem:[%s416 + $0x8] sm:$0xff] %v1296
        %1823 = vst [vmem:[%s416 + $0x10] sm:$0xff] %v1299
        %1824 = vst [vmem:[%s416 + $0x18] sm:$0xff] %v1301
        %1825 = vst [vmem:[%s416 + $0x20] sm:$0xff] %v1304
        %1826 = vst [vmem:[%s416 + $0x28] sm:$0xff] %v1306
        %1827 = vst [vmem:[%s416 + $0x30] sm:$0xff] %v1309
        %1828 = vst [vmem:[%s416 + $0x38] sm:$0xff] %v1311
        %1829 = vst [vmem:[%s416 + $0x40] sm:$0xff] %v1314
        %1830 = vst [vmem:[%s416 + $0x48] sm:$0xff] %v1316
        %1831 = vst [vmem:[%s416 + $0x50] sm:$0xff] %v1319
        %1832 = vst [vmem:[%s416 + $0x58] sm:$0xff] %v1321
        %1833 = vst [vmem:[%s416 + $0x60] sm:$0xff] %v1324
        %1834 = vst [vmem:[%s416 + $0x68] sm:$0xff] %v1326
        %1835 = vst [vmem:[%s416 + $0x70] sm:$0xff] %v1329
        %1836 = vst [vmem:[%s416 + $0x78] sm:$0xff] %v1331
        %1837 = vst [vmem:[%s416 + $0x80] sm:$0xff] %v1334
        %1838 = vst [vmem:[%s416 + $0x88] sm:$0xff] %v1336
        %1839 = vst [vmem:[%s416 + $0x90] sm:$0xff] %v1339
        %1840 = vst [vmem:[%s416 + $0x98] sm:$0xff] %v1341
        %1841 = vst [vmem:[%s416 + $0xa0] sm:$0xff] %v1344
        %1842 = vst [vmem:[%s416 + $0xa8] sm:$0xff] %v1346
        %1843 = vst [vmem:[%s416 + $0xb0] sm:$0xff] %v1349
        %1844 = vst [vmem:[%s416 + $0xb8] sm:$0xff] %v1351
        %1845 = vst [vmem:[%s416 + $0xc0] sm:$0xff] %v1354
        %1846 = vst [vmem:[%s416 + $0xc8] sm:$0xff] %v1356
        %1847 = vst [vmem:[%s416 + $0xd0] sm:$0xff] %v1359
        %1848 = vst [vmem:[%s416 + $0xd8] sm:$0xff] %v1361
        %1849 = vst [vmem:[%s416 + $0xe0] sm:$0xff] %v1364
        %1850 = vst [vmem:[%s416 + $0xe8] sm:$0xff] %v1366
        %1851 = vst [vmem:[%s416 + $0xf0] sm:$0xff] %v1369
        %1852 = vst [vmem:[%s416 + $0xf8] sm:$0xff] %v1371
        %s1853 = sand.u32 %s168, 1
        %s1854 = scalar_lea.sflag [#allocation4], %s1853
        %s1855 = sand.u32 %s168, 1
        %s1856 = smul.addr %s1855, 256
        %s1857 = scalar_lea.vmem [#allocation10], %s1856
        %s1858 = sand.u32 %s31, 1
        %s1859 = scalar_lea.sflag [#allocation12], %s1858
        %s1860 = sand.u32 %s198, 1
        %s1861 = smul.addr %s1860, 256
        %s1862 = scalar_lea.vmem [#allocation11], %s1861
        %s1863 = sand.u32 %s31, 1
        %s1864 = scalar_lea.sflag [#allocation12], %s1863
        %s1865 = sand.u32 %s228, 1
        %s1866 = smul.addr %s1865, 256
        %s1867 = scalar_lea.vmem [#allocation13], %s1866
        // Predicated region
        $region53: #{tpu_custom_call.1} parent=35 // pred_check
          %p1868 = pneg %p178
        $region54: #{tpu_custom_call.1} parent=35 // pred_check_branch
          %1870 = sbr.rel (%p1868) target = $region56
        $region55: #{tpu_custom_call.1} parent=35 // pred_region
          %s1871 = smul.u32 32, %s37
          %1873 = vsyncadd %s1854, 0
          %s1874 = smul.addr %s38, 32
          %s1875 = sadd.s32 %s1871, %s1874
          %s1876 = smul.addr %s36, 64
          %s1877 = sadd.s32 %s1875, %s1876
          %s1878 = smul.addr %s1877, 8
          %s1879 = scalar_lea.hbm %s4, %s1878
          %s1880 = sshll.u32 %s1857, 4
          %s1881 = int_to_ptr.vmem [resolvable:$true] %s1880
          %s1882 = sshll.u32 %s1879, 4
          %s1883 = int_to_ptr.hbm [resolvable:$true] %s1882
          %1888 = dma.vmem_to_hbm [thread:$0]  %s1881, 4096, %s1883, %s1854, 128, 128, 8
        $region56: #{tpu_custom_call.1} parent=35 // pred_fallthru
          _
        // Predicated region
        $region57: #{tpu_custom_call.1} parent=35 // pred_check
          %p1889 = pneg %p208
        $region58: #{tpu_custom_call.1} parent=35 // pred_check_branch
          %1891 = sbr.rel (%p1889) target = $region60
        $region59: #{tpu_custom_call.1} parent=35 // pred_region
          %s1892 = smul.u32 32, %s37
          %1894 = vsyncadd %s1859, 0
          %s1895 = smul.addr %s38, 32
          %s1896 = sadd.s32 %s1892, %s1895
          %s1897 = smul.addr %s36, 64
          %s1898 = sadd.s32 %s1896, %s1897
          %s1899 = smul.addr %s1898, 8
          %s1900 = scalar_lea.hbm %s5, %s1899
          %s1901 = sshll.u32 %s1862, 4
          %s1902 = int_to_ptr.vmem [resolvable:$true] %s1901
          %s1903 = sshll.u32 %s1900, 4
          %s1904 = int_to_ptr.hbm [resolvable:$true] %s1903
          %1909 = dma.vmem_to_hbm [thread:$0]  %s1902, 4096, %s1904, %s1859, 128, 128, 8
        $region60: #{tpu_custom_call.1} parent=35 // pred_fallthru
          _
        // Predicated region
        $region61: #{tpu_custom_call.1} parent=35 // pred_check
          %p1910 = pneg %p238
        $region62: #{tpu_custom_call.1} parent=35 // pred_check_branch
          %1912 = sbr.rel (%p1910) target = $region64
        $region63: #{tpu_custom_call.1} parent=35 // pred_region
          %s1913 = smul.u32 32, %s37
          %1915 = vsyncadd %s1864, 0
          %s1916 = smul.addr %s38, 32
          %s1917 = sadd.s32 %s1913, %s1916
          %s1918 = smul.addr %s36, 64
          %s1919 = sadd.s32 %s1917, %s1918
          %s1920 = smul.addr %s1919, 8
          %s1921 = scalar_lea.hbm %s6, %s1920
          %s1922 = sshll.u32 %s1867, 4
          %s1923 = int_to_ptr.vmem [resolvable:$true] %s1922
          %s1924 = sshll.u32 %s1921, 4
          %s1925 = int_to_ptr.hbm [resolvable:$true] %s1924
          %1930 = dma.vmem_to_hbm [thread:$0]  %s1923, 4096, %s1925, %s1864, 128, 128, 8
        $region64: #{tpu_custom_call.1} parent=35 // pred_fallthru
          _
      $region36: #{tpu_custom_call.1} parent=5 // pred_fallthru
        _
      %p1931 = scmp.le.s32.totalorder 2, %s26
      // Predicated region
      $region65: #{tpu_custom_call.1} parent=5 // pred_check
        %p1932 = pneg %p1931
      $region66: #{tpu_custom_call.1} parent=5 // pred_check_branch
        %1934 = sbr.rel (%p1932) target = $region68
      $region67: #{tpu_custom_call.1} parent=5 // pred_region
        %s1935 = ssub.s32 %s26, 2
        // Predicated region
        $region69: #{tpu_custom_call.1} parent=67 // pred_check
          %p1936 = pneg %p184
        $region70: #{tpu_custom_call.1} parent=67 // pred_check_branch
          %1938 = sbr.rel (%p1936) target = $region72
        $region71: #{tpu_custom_call.1} parent=67 // pred_region
          %s1939 = sand.u32 %s169, 1
          %s1940 = scalar_lea.sflag [#allocation4], %s1939
          %s1941 = sand.u32 %s169, 1
          %s1942 = smul.addr %s1941, 256
          %s1943 = scalar_lea.vmem [#allocation10], %s1942
          %1945 = dma.done %s1940, 4096
        $region72: #{tpu_custom_call.1} parent=67 // pred_fallthru
          _
        // Predicated region
        $region73: #{tpu_custom_call.1} parent=67 // pred_check
          %p1946 = pneg %p214
        $region74: #{tpu_custom_call.1} parent=67 // pred_check_branch
          %1948 = sbr.rel (%p1946) target = $region76
        $region75: #{tpu_custom_call.1} parent=67 // pred_region
          %s1949 = sand.u32 %s32, 1
          %s1950 = scalar_lea.sflag [#allocation12], %s1949
          %s1951 = sand.u32 %s199, 1
          %s1952 = smul.addr %s1951, 256
          %s1953 = scalar_lea.vmem [#allocation11], %s1952
          %1955 = dma.done %s1950, 4096
        $region76: #{tpu_custom_call.1} parent=67 // pred_fallthru
          _
        // Predicated region
        $region77: #{tpu_custom_call.1} parent=67 // pred_check
          %p1956 = pneg %p244
        $region78: #{tpu_custom_call.1} parent=67 // pred_check_branch
          %1958 = sbr.rel (%p1956) target = $region80
        $region79: #{tpu_custom_call.1} parent=67 // pred_region
          %s1959 = sand.u32 %s32, 1
          %s1960 = scalar_lea.sflag [#allocation12], %s1959
          %s1961 = sand.u32 %s229, 1
          %s1962 = smul.addr %s1961, 256
          %s1963 = scalar_lea.vmem [#allocation13], %s1962
          %1965 = dma.done %s1960, 4096
        $region80: #{tpu_custom_call.1} parent=67 // pred_fallthru
          _
      $region68: #{tpu_custom_call.1} parent=5 // pred_fallthru
        _
    $region6: #{tpu_custom_call.1} parent=1 // loop_footer
      %s30 = sadd.s32 1, %s26
    $region7: #{tpu_custom_call.1} parent=1 // loop_footer_branch
      %25 = sbr.rel target = $region3
    $region8: #{tpu_custom_call.1} parent=1 // loop_exit
      _
    %1966 = vsyncpa [#allocation3], 1
    %s1967 = scalar_lea.sflag [#allocation3], 1
    %1968 = vsyncpa %s1967, 1
    %1969 = vsyncpa [#allocation6], 1
    %s1970 = scalar_lea.sflag [#allocation6], 1
    %1971 = vsyncpa %s1970, 1
    %1972 = vsyncpa [#allocation9], 1
    %1973 = vsyncpa [#allocation4], 1
    %s1974 = scalar_lea.sflag [#allocation4], 1
    %1975 = vsyncpa %s1974, 1
    %1976 = vsyncpa [#allocation12], 1
    %s1977 = scalar_lea.sflag [#allocation12], 1
    %1978 = vsyncpa %s1977, 1

</llo_original>
